<compile_context>
chip_gen: v7x
topology: tpu7x:2x2x1
jax: 0.10.0
libtpu: 0.0.40
codegen_flags: <defaults>
</compile_context>

<pallas_src>
import functools

import jax
import jax.numpy as jnp
from jax.experimental import pallas as pl
from jax.experimental.pallas import tpu as pltpu


def _map_loss_kernel(in_ref, out_ref, *, margin, gamma, n_valid):
    """One grid step == one block of `tl` labels (tasks).

    in_ref  : (tl, 8, n_pad) sublanes = [valid, pos_mask, f, u_all_old, u_pos_old, 0, 0, 0]
    out_ref : (tl, 8, n_pad) sublanes = [per_sample_loss, u_all_new, u_pos_new, junk...]
    """
    tl, _, n_pad = in_ref.shape
    n_f = jnp.float32(n_valid)
    inv_n = jnp.float32(1.0 / n_valid)
    pad_rows = jnp.zeros((5, n_pad), jnp.float32)          # hoisted: output-tile filler

    for l in range(tl):
        blk = in_ref[l]                                    # (8, n_pad)
        pm_row = blk[1:2, :]                               # (1, n_pad) positive mask
        f_row = blk[2:3, :]                                # (1, n_pad) predictions
        ua_old = blk[3:4, :]                               # (1, n_pad) gathered u_all
        up_old = blk[4:5, :]                               # (1, n_pad) gathered u_pos
        pos = pm_row > 0.0

        # surT[a, p] = max(margin - (f[p] - f[a]), 0)^2  ('p' on lanes, 'a' on sublanes)
        f_col = jnp.transpose(f_row)                       # (n_pad, 1) — only transpose
        hinge = jnp.maximum(margin - (f_row - f_col), 0.0) # (n_pad, n_pad)
        surT = hinge * hinge

        # One MXU matmul; the packed input block is the lhs:
        #   sums[0] = S_all[p] = sum_a valid[a] * sur[p, a]
        #   sums[1] = S_pos[p] = sum_a pm[a]    * sur[p, a]
        # (lhs rows 2..7 ride along for free — their output rows are never read.)
        sums = jnp.dot(blk, surT, preferred_element_type=jnp.float32)   # (8, n_pad)
        s_all = sums[0:1, :]                               # (1, n_pad), lane-major
        s_pos = sums[1:2, :]

        # Moving-average state update (only positive samples are written back).
        ua_new = (1.0 - gamma) * ua_old + gamma * (s_all * inv_n)
        up_new = (1.0 - gamma) * up_old + gamma * (s_pos * inv_n)
        ua_w = jnp.where(pos, ua_new, ua_old)
        up_w = jnp.where(pos, up_new, up_old)

        # sum_a p_i[p,a] * sur[p,a]
        #   = (u_pos_new*S_all - u_all_new*S_pos) / u_all_new^2
        #   = (1-gamma)*(u_pos_old*S_all - u_all_old*S_pos) / u_all_new^2   (exact identity)
        denom = jnp.where(pos, ua_new * ua_new, 1.0)
        numer = (1.0 - gamma) * (up_old * s_all - ua_old * s_pos)
        per_p = numer / denom

        # Reference asserts num_pos > 0; the guard only protects padded label blocks.
        num_pos = jnp.maximum(jnp.sum(pm_row), 1.0)
        scale = 1.0 / (num_pos * n_f)
        # TODO(synk): top_k > -1 sigmoid selector branch not implemented (default top_k=-1).
        loss_row = jnp.where(pos, per_p, 0.0) * scale      # per-sample loss row

        # Single full-tile, lane-dense store of all three per-label result rows.
        out_ref[l] = jnp.concatenate([loss_row, ua_w, up_w, pad_rows], axis=0)


def _round_up(x, m):
    return ((x + m - 1) // m) * m


def mean_average_precision_loss(y_pred, y_true, index, u_all, u_pos,
                                *, margin=1.0, gamma=0.9, labels_per_block=8):
    """Functional forward pass. Returns (loss, u_all_updated, u_pos_updated)."""
    n, num_labels = y_pred.shape
    n_pad = _round_up(max(n, 128), 128)

    # Labels per grid step: amortize per-step overhead, but keep the per-label
    # (n_pad x n_pad) pairwise temporaries (hinge + surT, ~8 bytes/elem) inside VMEM.
    # TODO(synk): for very large n (>~2K) tile the column axis (inner grid axis +
    # S_all/S_pos accumulation in scratch) to make the temporary O(n * tile).
    vmem_budget = 8 << 20
    tl = max(1, min(num_labels, labels_per_block,
                    vmem_budget // (8 * n_pad * n_pad)))
    l_pad = _round_up(num_labels, tl)

    # ---- plain-JAX glue: label-major layout + gather of state at `index` ----
    f_l = jnp.transpose(y_pred).astype(jnp.float32)                    # (L, n)
    pm_l = (jnp.transpose(y_true) == 1).astype(jnp.float32)            # (L, n)
    ua_g = u_all[:, index, 0].astype(jnp.float32)                      # (L, n)
    up_g = u_pos[:, index, 0].astype(jnp.float32)                      # (L, n)
    valid = jnp.ones((num_labels, n), jnp.float32)
    zero = jnp.zeros((num_labels, n), jnp.float32)

    # Pack the five per-label vectors onto sublanes; pad lanes (batch) and labels.
    packed = jnp.stack([valid, pm_l, f_l, ua_g, up_g, zero, zero, zero], axis=1)
    packed = jnp.pad(packed, ((0, l_pad - num_labels), (0, 0), (0, n_pad - n)))

    kernel = functools.partial(_map_loss_kernel, margin=float(margin),
                               gamma=float(gamma), n_valid=n)

    blk = pl.BlockSpec((tl, 8, n_pad), lambda i: (i, 0, 0))
    out = pl.pallas_call(
        kernel,
        out_shape=jax.ShapeDtypeStruct((l_pad, 8, n_pad), jnp.float32),
        grid=(l_pad // tl,),
        in_specs=[blk],
        out_specs=blk,
        compiler_params=pltpu.CompilerParams(
            dimension_semantics=("parallel",),         # label blocks are independent
            vmem_limit_bytes=32 << 20),
    )(packed)

    # ---- plain-JAX glue: final reduction + scatter of updated state ----
    loss = jnp.sum(out[:num_labels, 0, :]) / num_labels
    # TODO(synk): for large data_len, jit-donate u_all/u_pos so this scatter updates
    # in place instead of copying the full state each call.
    u_all_new = u_all.at[:, index, 0].set(out[:num_labels, 1, :n].astype(u_all.dtype))
    u_pos_new = u_pos.at[:, index, 0].set(out[:num_labels, 2, :n].astype(u_pos.dtype))
    return loss, u_all_new, u_pos_new


def _reference_forward(y_pred, y_true, index, u_all, u_pos, margin, gamma):
    """Pure-jnp dense re-implementation of the PyTorch forward for checking."""
    n, num_labels = y_pred.shape
    u_all_new, u_pos_new = u_all, u_pos
    total = jnp.float32(0.0)
    for idx in range(num_labels):
        f = y_pred[:, idx].astype(jnp.float32)
        pm = (y_true[:, idx] == 1).astype(jnp.float32)
        ua_g = u_all[idx, index, 0]
        up_g = u_pos[idx, index, 0]
        diff = f[:, None] - f[None, :]
        sur = jnp.maximum(margin - diff, 0.0) ** 2
        ua_n = (1 - gamma) * ua_g + gamma * sur.mean(axis=1)
        up_n = (1 - gamma) * up_g + gamma * (sur * pm[None, :]).mean(axis=1)
        denom = jnp.where(pm > 0, ua_n ** 2, 1.0)
        p_mat = (up_n[:, None] - ua_n[:, None] * pm[None, :]) / denom[:, None]
        num_pos = pm.sum()
        total = total + jnp.sum(p_mat * sur * pm[:, None]) / (num_pos * n)
        u_all_new = u_all_new.at[idx, index, 0].set(jnp.where(pm > 0, ua_n, ua_g))
        u_pos_new = u_pos_new.at[idx, index, 0].set(jnp.where(pm > 0, up_n, up_g))
    return total / num_labels, u_all_new, u_pos_new


if __name__ == "__main__":
    key = jax.random.PRNGKey(0)
    k1, k2, k3, k4, k5 = jax.random.split(key, 5)

    batch = 64           # N (also data_len here)
    num_labels = 4       # L
    data_len = 64
    margin, gamma = 1.0, 0.9

    y_pred = jax.random.normal(k1, (batch, num_labels), dtype=jnp.float32)
    y_true = (jax.random.uniform(k2, (batch, num_labels)) > 0.5).astype(jnp.float32)
    # guarantee at least one positive sample per label (reference asserts this)
    y_true = y_true.at[0, :].set(1.0)
    index = jax.random.permutation(k3, jnp.arange(data_len, dtype=jnp.int32))

    # Non-zero running state (as after a few optimizer steps): with the module's
    # all-zero init the first-step loss is identically 0, making the check vacuous.
    u_all = jax.random.uniform(k4, (num_labels, data_len, 1),
                               minval=0.5, maxval=1.5, dtype=jnp.float32)
    u_pos = jax.random.uniform(k5, (num_labels, data_len, 1),
                               minval=0.1, maxval=0.5, dtype=jnp.float32)

    loss, u_all_new, u_pos_new = mean_average_precision_loss(
        y_pred, y_true, index, u_all, u_pos, margin=margin, gamma=gamma)
    jax.block_until_ready((loss, u_all_new, u_pos_new))

    ref_loss, ref_ua, ref_up = _reference_forward(
        y_pred, y_true, index, u_all, u_pos, margin, gamma)
    assert jnp.allclose(loss, ref_loss, rtol=2e-3, atol=2e-4), (loss, ref_loss)
    assert jnp.allclose(u_all_new, ref_ua, rtol=2e-3, atol=2e-4)
    assert jnp.allclose(u_pos_new, ref_up, rtol=2e-3, atol=2e-4)

    print("KERNEL_OK")
</pallas_src>

<mosaic_0001>
module attributes {stable_mosaic.version = 11 : i64} {
  func.func @_map_loss_kernel(%arg0: i32, %arg1: memref<4x8x128xf32, #tpu.memory_space<vmem>>, %arg2: memref<4x8x128xf32, #tpu.memory_space<vmem>>) attributes {dimension_semantics = [#tpu.dimension_semantics<parallel>], iteration_bounds = array<i64: 1>, scalar_prefetch = 0 : i64, scratch_operands = 0 : i64, tpu.core_type = #tpu.core_type<tc>, window_params = [{transform_indices = @transform_0, window_bounds = array<i64: 4, 8, 128>}, {transform_indices = @transform_1, window_bounds = array<i64: 4, 8, 128>}]} {
    %cst = arith.constant 0.000000e+00 : f32
    %0 = vector.broadcast %cst : f32 to vector<5x128xf32>
    %c0 = arith.constant 0 : index
    %c0_0 = arith.constant 0 : index
    %c0_1 = arith.constant 0 : index
    %1 = vector.load %arg1[%c0, %c0_0, %c0_1] : memref<4x8x128xf32, #tpu.memory_space<vmem>>, vector<1x8x128xf32>
    %2 = vector.shape_cast %1 : vector<1x8x128xf32> to vector<8x128xf32>
    %3 = vector.extract_strided_slice %2 {offsets = [1, 0], sizes = [1, 128], strides = [1, 1]} : vector<8x128xf32> to vector<1x128xf32>
    %4 = vector.extract_strided_slice %2 {offsets = [2, 0], sizes = [1, 128], strides = [1, 1]} : vector<8x128xf32> to vector<1x128xf32>
    %5 = vector.extract_strided_slice %2 {offsets = [3, 0], sizes = [1, 128], strides = [1, 1]} : vector<8x128xf32> to vector<1x128xf32>
    %6 = vector.extract_strided_slice %2 {offsets = [4, 0], sizes = [1, 128], strides = [1, 1]} : vector<8x128xf32> to vector<1x128xf32>
    %cst_2 = arith.constant 0.000000e+00 : f32
    %7 = vector.broadcast %cst_2 : f32 to vector<1x128xf32>
    %8 = arith.cmpf ogt, %3, %7 : vector<1x128xf32>
    %9 = tpu.transpose %4, [1, 0] : vector<1x128xf32> -> vector<128x1xf32>
    %10 = vector.broadcast %4 : vector<1x128xf32> to vector<128x128xf32>
    %11 = vector.broadcast %9 : vector<128x1xf32> to vector<128x128xf32>
    %12 = arith.subf %10, %11 : vector<128x128xf32>
    %cst_3 = arith.constant 1.000000e+00 : f32
    %13 = vector.broadcast %cst_3 : f32 to vector<128x128xf32>
    %14 = arith.subf %13, %12 : vector<128x128xf32>
    %cst_4 = arith.constant 0.000000e+00 : f32
    %15 = vector.broadcast %cst_4 : f32 to vector<128x128xf32>
    %16 = arith.maximumf %14, %15 : vector<128x128xf32>
    %17 = arith.mulf %16, %16 : vector<128x128xf32>
    %cst_5 = arith.constant dense<0.000000e+00> : vector<8x128xf32>
    %18 = tpu.matmul %2, %17, %cst_5 {dimension_numbers = #tpu.dot_dimension_numbers<[1], [0], [0], [1], [0, 0, 1, 1], [], []>} : vector<8x128xf32>, vector<128x128xf32>, vector<8x128xf32> -> vector<8x128xf32>
    %19 = vector.extract_strided_slice %18 {offsets = [0, 0], sizes = [1, 128], strides = [1, 1]} : vector<8x128xf32> to vector<1x128xf32>
    %20 = vector.extract_strided_slice %18 {offsets = [1, 0], sizes = [1, 128], strides = [1, 1]} : vector<8x128xf32> to vector<1x128xf32>
    %cst_6 = arith.constant 1.000000e-01 : f32
    %21 = vector.broadcast %cst_6 : f32 to vector<1x128xf32>
    %22 = arith.mulf %21, %5 : vector<1x128xf32>
    %cst_7 = arith.constant 1.562500e-02 : f32
    %23 = vector.broadcast %cst_7 : f32 to vector<1x128xf32>
    %24 = arith.mulf %19, %23 : vector<1x128xf32>
    %cst_8 = arith.constant 0.899999976 : f32
    %25 = vector.broadcast %cst_8 : f32 to vector<1x128xf32>
    %26 = arith.mulf %25, %24 : vector<1x128xf32>
    %27 = arith.addf %22, %26 : vector<1x128xf32>
    %cst_9 = arith.constant 1.000000e-01 : f32
    %28 = vector.broadcast %cst_9 : f32 to vector<1x128xf32>
    %29 = arith.mulf %28, %6 : vector<1x128xf32>
    %cst_10 = arith.constant 1.562500e-02 : f32
    %30 = vector.broadcast %cst_10 : f32 to vector<1x128xf32>
    %31 = arith.mulf %20, %30 : vector<1x128xf32>
    %cst_11 = arith.constant 0.899999976 : f32
    %32 = vector.broadcast %cst_11 : f32 to vector<1x128xf32>
    %33 = arith.mulf %32, %31 : vector<1x128xf32>
    %34 = arith.addf %29, %33 : vector<1x128xf32>
    %35 = arith.select %8, %27, %5 : vector<1x128xi1>, vector<1x128xf32>
    %36 = arith.select %8, %34, %6 : vector<1x128xi1>, vector<1x128xf32>
    %37 = arith.mulf %27, %27 : vector<1x128xf32>
    %cst_12 = arith.constant 1.000000e+00 : f32
    %38 = vector.broadcast %cst_12 : f32 to vector<1x128xf32>
    %39 = arith.select %8, %37, %38 : vector<1x128xi1>, vector<1x128xf32>
    %40 = arith.mulf %6, %19 : vector<1x128xf32>
    %41 = arith.mulf %5, %20 : vector<1x128xf32>
    %42 = arith.subf %40, %41 : vector<1x128xf32>
    %cst_13 = arith.constant 1.000000e-01 : f32
    %43 = vector.broadcast %cst_13 : f32 to vector<1x128xf32>
    %44 = arith.mulf %43, %42 : vector<1x128xf32>
    %45 = arith.divf %44, %39 : vector<1x128xf32>
    %46 = vector.shape_cast %3 : vector<1x128xf32> to vector<1x1x128xf32>
    %cst_14 = arith.constant dense<0.000000e+00> : vector<1xf32>
    %47 = vector.multi_reduction <add>, %46, %cst_14 [1, 2] : vector<1x1x128xf32> to vector<1xf32>
    %48 = vector.shape_cast %47 : vector<1xf32> to vector<1x1x1xf32>
    %49 = vector.extract %48[0, 0, 0] : f32 from vector<1x1x1xf32>
    %cst_15 = arith.constant 1.000000e+00 : f32
    %50 = arith.maximumf %49, %cst_15 : f32
    %cst_16 = arith.constant 6.400000e+01 : f32
    %51 = arith.mulf %50, %cst_16 : f32
    %cst_17 = arith.constant 1.000000e+00 : f32
    %52 = arith.divf %cst_17, %51 : f32
    %cst_18 = arith.constant 0.000000e+00 : f32
    %53 = vector.broadcast %cst_18 : f32 to vector<1x128xf32>
    %54 = arith.select %8, %45, %53 : vector<1x128xi1>, vector<1x128xf32>
    %55 = vector.broadcast %52 : f32 to vector<1x128xf32>
    %56 = arith.mulf %54, %55 : vector<1x128xf32>
    %57 = tpu.concatenate %56, %35, %36, %0 in 0 : vector<1x128xf32>, vector<1x128xf32>, vector<1x128xf32>, vector<5x128xf32> -> vector<8x128xf32>
    %c0_19 = arith.constant 0 : index
    %c0_20 = arith.constant 0 : index
    %c0_21 = arith.constant 0 : index
    %58 = vector.load %arg2[%c0_19, %c0_20, %c0_21] : memref<4x8x128xf32, #tpu.memory_space<vmem>>, vector<1x8x128xf32>
    %59 = vector.shape_cast %58 : vector<1x8x128xf32> to vector<8x128xf32>
    %60 = vector.shape_cast %57 : vector<8x128xf32> to vector<1x8x128xf32>
    tpu.vector_store %arg2[%c0_19, %c0_20, %c0_21], %60 {strides = array<i32>} : memref<4x8x128xf32, #tpu.memory_space<vmem>>, vector<1x8x128xf32>,
    %c1 = arith.constant 1 : index
    %c0_22 = arith.constant 0 : index
    %c0_23 = arith.constant 0 : index
    %61 = vector.load %arg1[%c1, %c0_22, %c0_23] : memref<4x8x128xf32, #tpu.memory_space<vmem>>, vector<1x8x128xf32>
    %62 = vector.shape_cast %61 : vector<1x8x128xf32> to vector<8x128xf32>
    %63 = vector.extract_strided_slice %62 {offsets = [1, 0], sizes = [1, 128], strides = [1, 1]} : vector<8x128xf32> to vector<1x128xf32>
    %64 = vector.extract_strided_slice %62 {offsets = [2, 0], sizes = [1, 128], strides = [1, 1]} : vector<8x128xf32> to vector<1x128xf32>
    %65 = vector.extract_strided_slice %62 {offsets = [3, 0], sizes = [1, 128], strides = [1, 1]} : vector<8x128xf32> to vector<1x128xf32>
    %66 = vector.extract_strided_slice %62 {offsets = [4, 0], sizes = [1, 128], strides = [1, 1]} : vector<8x128xf32> to vector<1x128xf32>
    %cst_24 = arith.constant 0.000000e+00 : f32
    %67 = vector.broadcast %cst_24 : f32 to vector<1x128xf32>
    %68 = arith.cmpf ogt, %63, %67 : vector<1x128xf32>
    %69 = tpu.transpose %64, [1, 0] : vector<1x128xf32> -> vector<128x1xf32>
    %70 = vector.broadcast %64 : vector<1x128xf32> to vector<128x128xf32>
    %71 = vector.broadcast %69 : vector<128x1xf32> to vector<128x128xf32>
    %72 = arith.subf %70, %71 : vector<128x128xf32>
    %cst_25 = arith.constant 1.000000e+00 : f32
    %73 = vector.broadcast %cst_25 : f32 to vector<128x128xf32>
    %74 = arith.subf %73, %72 : vector<128x128xf32>
    %cst_26 = arith.constant 0.000000e+00 : f32
    %75 = vector.broadcast %cst_26 : f32 to vector<128x128xf32>
    %76 = arith.maximumf %74, %75 : vector<128x128xf32>
    %77 = arith.mulf %76, %76 : vector<128x128xf32>
    %cst_27 = arith.constant dense<0.000000e+00> : vector<8x128xf32>
    %78 = tpu.matmul %62, %77, %cst_27 {dimension_numbers = #tpu.dot_dimension_numbers<[1], [0], [0], [1], [0, 0, 1, 1], [], []>} : vector<8x128xf32>, vector<128x128xf32>, vector<8x128xf32> -> vector<8x128xf32>
    %79 = vector.extract_strided_slice %78 {offsets = [0, 0], sizes = [1, 128], strides = [1, 1]} : vector<8x128xf32> to vector<1x128xf32>
    %80 = vector.extract_strided_slice %78 {offsets = [1, 0], sizes = [1, 128], strides = [1, 1]} : vector<8x128xf32> to vector<1x128xf32>
    %cst_28 = arith.constant 1.000000e-01 : f32
    %81 = vector.broadcast %cst_28 : f32 to vector<1x128xf32>
    %82 = arith.mulf %81, %65 : vector<1x128xf32>
    %cst_29 = arith.constant 1.562500e-02 : f32
    %83 = vector.broadcast %cst_29 : f32 to vector<1x128xf32>
    %84 = arith.mulf %79, %83 : vector<1x128xf32>
    %cst_30 = arith.constant 0.899999976 : f32
    %85 = vector.broadcast %cst_30 : f32 to vector<1x128xf32>
    %86 = arith.mulf %85, %84 : vector<1x128xf32>
    %87 = arith.addf %82, %86 : vector<1x128xf32>
    %cst_31 = arith.constant 1.000000e-01 : f32
    %88 = vector.broadcast %cst_31 : f32 to vector<1x128xf32>
    %89 = arith.mulf %88, %66 : vector<1x128xf32>
    %cst_32 = arith.constant 1.562500e-02 : f32
    %90 = vector.broadcast %cst_32 : f32 to vector<1x128xf32>
    %91 = arith.mulf %80, %90 : vector<1x128xf32>
    %cst_33 = arith.constant 0.899999976 : f32
    %92 = vector.broadcast %cst_33 : f32 to vector<1x128xf32>
    %93 = arith.mulf %92, %91 : vector<1x128xf32>
    %94 = arith.addf %89, %93 : vector<1x128xf32>
    %95 = arith.select %68, %87, %65 : vector<1x128xi1>, vector<1x128xf32>
    %96 = arith.select %68, %94, %66 : vector<1x128xi1>, vector<1x128xf32>
    %97 = arith.mulf %87, %87 : vector<1x128xf32>
    %cst_34 = arith.constant 1.000000e+00 : f32
    %98 = vector.broadcast %cst_34 : f32 to vector<1x128xf32>
    %99 = arith.select %68, %97, %98 : vector<1x128xi1>, vector<1x128xf32>
    %100 = arith.mulf %66, %79 : vector<1x128xf32>
    %101 = arith.mulf %65, %80 : vector<1x128xf32>
    %102 = arith.subf %100, %101 : vector<1x128xf32>
    %cst_35 = arith.constant 1.000000e-01 : f32
    %103 = vector.broadcast %cst_35 : f32 to vector<1x128xf32>
    %104 = arith.mulf %103, %102 : vector<1x128xf32>
    %105 = arith.divf %104, %99 : vector<1x128xf32>
    %106 = vector.shape_cast %63 : vector<1x128xf32> to vector<1x1x128xf32>
    %cst_36 = arith.constant dense<0.000000e+00> : vector<1xf32>
    %107 = vector.multi_reduction <add>, %106, %cst_36 [1, 2] : vector<1x1x128xf32> to vector<1xf32>
    %108 = vector.shape_cast %107 : vector<1xf32> to vector<1x1x1xf32>
    %109 = vector.extract %108[0, 0, 0] : f32 from vector<1x1x1xf32>
    %cst_37 = arith.constant 1.000000e+00 : f32
    %110 = arith.maximumf %109, %cst_37 : f32
    %cst_38 = arith.constant 6.400000e+01 : f32
    %111 = arith.mulf %110, %cst_38 : f32
    %cst_39 = arith.constant 1.000000e+00 : f32
    %112 = arith.divf %cst_39, %111 : f32
    %cst_40 = arith.constant 0.000000e+00 : f32
    %113 = vector.broadcast %cst_40 : f32 to vector<1x128xf32>
    %114 = arith.select %68, %105, %113 : vector<1x128xi1>, vector<1x128xf32>
    %115 = vector.broadcast %112 : f32 to vector<1x128xf32>
    %116 = arith.mulf %114, %115 : vector<1x128xf32>
    %117 = tpu.concatenate %116, %95, %96, %0 in 0 : vector<1x128xf32>, vector<1x128xf32>, vector<1x128xf32>, vector<5x128xf32> -> vector<8x128xf32>
    %c1_41 = arith.constant 1 : index
    %c0_42 = arith.constant 0 : index
    %c0_43 = arith.constant 0 : index
    %118 = vector.load %arg2[%c1_41, %c0_42, %c0_43] : memref<4x8x128xf32, #tpu.memory_space<vmem>>, vector<1x8x128xf32>
    %119 = vector.shape_cast %118 : vector<1x8x128xf32> to vector<8x128xf32>
    %120 = vector.shape_cast %117 : vector<8x128xf32> to vector<1x8x128xf32>
    tpu.vector_store %arg2[%c1_41, %c0_42, %c0_43], %120 {strides = array<i32>} : memref<4x8x128xf32, #tpu.memory_space<vmem>>, vector<1x8x128xf32>,
    %c2 = arith.constant 2 : index
    %c0_44 = arith.constant 0 : index
    %c0_45 = arith.constant 0 : index
    %121 = vector.load %arg1[%c2, %c0_44, %c0_45] : memref<4x8x128xf32, #tpu.memory_space<vmem>>, vector<1x8x128xf32>
    %122 = vector.shape_cast %121 : vector<1x8x128xf32> to vector<8x128xf32>
    %123 = vector.extract_strided_slice %122 {offsets = [1, 0], sizes = [1, 128], strides = [1, 1]} : vector<8x128xf32> to vector<1x128xf32>
    %124 = vector.extract_strided_slice %122 {offsets = [2, 0], sizes = [1, 128], strides = [1, 1]} : vector<8x128xf32> to vector<1x128xf32>
    %125 = vector.extract_strided_slice %122 {offsets = [3, 0], sizes = [1, 128], strides = [1, 1]} : vector<8x128xf32> to vector<1x128xf32>
    %126 = vector.extract_strided_slice %122 {offsets = [4, 0], sizes = [1, 128], strides = [1, 1]} : vector<8x128xf32> to vector<1x128xf32>
    %cst_46 = arith.constant 0.000000e+00 : f32
    %127 = vector.broadcast %cst_46 : f32 to vector<1x128xf32>
    %128 = arith.cmpf ogt, %123, %127 : vector<1x128xf32>
    %129 = tpu.transpose %124, [1, 0] : vector<1x128xf32> -> vector<128x1xf32>
    %130 = vector.broadcast %124 : vector<1x128xf32> to vector<128x128xf32>
    %131 = vector.broadcast %129 : vector<128x1xf32> to vector<128x128xf32>
    %132 = arith.subf %130, %131 : vector<128x128xf32>
    %cst_47 = arith.constant 1.000000e+00 : f32
    %133 = vector.broadcast %cst_47 : f32 to vector<128x128xf32>
    %134 = arith.subf %133, %132 : vector<128x128xf32>
    %cst_48 = arith.constant 0.000000e+00 : f32
    %135 = vector.broadcast %cst_48 : f32 to vector<128x128xf32>
    %136 = arith.maximumf %134, %135 : vector<128x128xf32>
    %137 = arith.mulf %136, %136 : vector<128x128xf32>
    %cst_49 = arith.constant dense<0.000000e+00> : vector<8x128xf32>
    %138 = tpu.matmul %122, %137, %cst_49 {dimension_numbers = #tpu.dot_dimension_numbers<[1], [0], [0], [1], [0, 0, 1, 1], [], []>} : vector<8x128xf32>, vector<128x128xf32>, vector<8x128xf32> -> vector<8x128xf32>
    %139 = vector.extract_strided_slice %138 {offsets = [0, 0], sizes = [1, 128], strides = [1, 1]} : vector<8x128xf32> to vector<1x128xf32>
    %140 = vector.extract_strided_slice %138 {offsets = [1, 0], sizes = [1, 128], strides = [1, 1]} : vector<8x128xf32> to vector<1x128xf32>
    %cst_50 = arith.constant 1.000000e-01 : f32
    %141 = vector.broadcast %cst_50 : f32 to vector<1x128xf32>
    %142 = arith.mulf %141, %125 : vector<1x128xf32>
    %cst_51 = arith.constant 1.562500e-02 : f32
    %143 = vector.broadcast %cst_51 : f32 to vector<1x128xf32>
    %144 = arith.mulf %139, %143 : vector<1x128xf32>
    %cst_52 = arith.constant 0.899999976 : f32
    %145 = vector.broadcast %cst_52 : f32 to vector<1x128xf32>
    %146 = arith.mulf %145, %144 : vector<1x128xf32>
    %147 = arith.addf %142, %146 : vector<1x128xf32>
    %cst_53 = arith.constant 1.000000e-01 : f32
    %148 = vector.broadcast %cst_53 : f32 to vector<1x128xf32>
    %149 = arith.mulf %148, %126 : vector<1x128xf32>
    %cst_54 = arith.constant 1.562500e-02 : f32
    %150 = vector.broadcast %cst_54 : f32 to vector<1x128xf32>
    %151 = arith.mulf %140, %150 : vector<1x128xf32>
    %cst_55 = arith.constant 0.899999976 : f32
    %152 = vector.broadcast %cst_55 : f32 to vector<1x128xf32>
    %153 = arith.mulf %152, %151 : vector<1x128xf32>
    %154 = arith.addf %149, %153 : vector<1x128xf32>
    %155 = arith.select %128, %147, %125 : vector<1x128xi1>, vector<1x128xf32>
    %156 = arith.select %128, %154, %126 : vector<1x128xi1>, vector<1x128xf32>
    %157 = arith.mulf %147, %147 : vector<1x128xf32>
    %cst_56 = arith.constant 1.000000e+00 : f32
    %158 = vector.broadcast %cst_56 : f32 to vector<1x128xf32>
    %159 = arith.select %128, %157, %158 : vector<1x128xi1>, vector<1x128xf32>
    %160 = arith.mulf %126, %139 : vector<1x128xf32>
    %161 = arith.mulf %125, %140 : vector<1x128xf32>
    %162 = arith.subf %160, %161 : vector<1x128xf32>
    %cst_57 = arith.constant 1.000000e-01 : f32
    %163 = vector.broadcast %cst_57 : f32 to vector<1x128xf32>
    %164 = arith.mulf %163, %162 : vector<1x128xf32>
    %165 = arith.divf %164, %159 : vector<1x128xf32>
    %166 = vector.shape_cast %123 : vector<1x128xf32> to vector<1x1x128xf32>
    %cst_58 = arith.constant dense<0.000000e+00> : vector<1xf32>
    %167 = vector.multi_reduction <add>, %166, %cst_58 [1, 2] : vector<1x1x128xf32> to vector<1xf32>
    %168 = vector.shape_cast %167 : vector<1xf32> to vector<1x1x1xf32>
    %169 = vector.extract %168[0, 0, 0] : f32 from vector<1x1x1xf32>
    %cst_59 = arith.constant 1.000000e+00 : f32
    %170 = arith.maximumf %169, %cst_59 : f32
    %cst_60 = arith.constant 6.400000e+01 : f32
    %171 = arith.mulf %170, %cst_60 : f32
    %cst_61 = arith.constant 1.000000e+00 : f32
    %172 = arith.divf %cst_61, %171 : f32
    %cst_62 = arith.constant 0.000000e+00 : f32
    %173 = vector.broadcast %cst_62 : f32 to vector<1x128xf32>
    %174 = arith.select %128, %165, %173 : vector<1x128xi1>, vector<1x128xf32>
    %175 = vector.broadcast %172 : f32 to vector<1x128xf32>
    %176 = arith.mulf %174, %175 : vector<1x128xf32>
    %177 = tpu.concatenate %176, %155, %156, %0 in 0 : vector<1x128xf32>, vector<1x128xf32>, vector<1x128xf32>, vector<5x128xf32> -> vector<8x128xf32>
    %c2_63 = arith.constant 2 : index
    %c0_64 = arith.constant 0 : index
    %c0_65 = arith.constant 0 : index
    %178 = vector.load %arg2[%c2_63, %c0_64, %c0_65] : memref<4x8x128xf32, #tpu.memory_space<vmem>>, vector<1x8x128xf32>
    %179 = vector.shape_cast %178 : vector<1x8x128xf32> to vector<8x128xf32>
    %180 = vector.shape_cast %177 : vector<8x128xf32> to vector<1x8x128xf32>
    tpu.vector_store %arg2[%c2_63, %c0_64, %c0_65], %180 {strides = array<i32>} : memref<4x8x128xf32, #tpu.memory_space<vmem>>, vector<1x8x128xf32>,
    %c3 = arith.constant 3 : index
    %c0_66 = arith.constant 0 : index
    %c0_67 = arith.constant 0 : index
    %181 = vector.load %arg1[%c3, %c0_66, %c0_67] : memref<4x8x128xf32, #tpu.memory_space<vmem>>, vector<1x8x128xf32>
    %182 = vector.shape_cast %181 : vector<1x8x128xf32> to vector<8x128xf32>
    %183 = vector.extract_strided_slice %182 {offsets = [1, 0], sizes = [1, 128], strides = [1, 1]} : vector<8x128xf32> to vector<1x128xf32>
    %184 = vector.extract_strided_slice %182 {offsets = [2, 0], sizes = [1, 128], strides = [1, 1]} : vector<8x128xf32> to vector<1x128xf32>
    %185 = vector.extract_strided_slice %182 {offsets = [3, 0], sizes = [1, 128], strides = [1, 1]} : vector<8x128xf32> to vector<1x128xf32>
    %186 = vector.extract_strided_slice %182 {offsets = [4, 0], sizes = [1, 128], strides = [1, 1]} : vector<8x128xf32> to vector<1x128xf32>
    %cst_68 = arith.constant 0.000000e+00 : f32
    %187 = vector.broadcast %cst_68 : f32 to vector<1x128xf32>
    %188 = arith.cmpf ogt, %183, %187 : vector<1x128xf32>
    %189 = tpu.transpose %184, [1, 0] : vector<1x128xf32> -> vector<128x1xf32>
    %190 = vector.broadcast %184 : vector<1x128xf32> to vector<128x128xf32>
    %191 = vector.broadcast %189 : vector<128x1xf32> to vector<128x128xf32>
    %192 = arith.subf %190, %191 : vector<128x128xf32>
    %cst_69 = arith.constant 1.000000e+00 : f32
    %193 = vector.broadcast %cst_69 : f32 to vector<128x128xf32>
    %194 = arith.subf %193, %192 : vector<128x128xf32>
    %cst_70 = arith.constant 0.000000e+00 : f32
    %195 = vector.broadcast %cst_70 : f32 to vector<128x128xf32>
    %196 = arith.maximumf %194, %195 : vector<128x128xf32>
    %197 = arith.mulf %196, %196 : vector<128x128xf32>
    %cst_71 = arith.constant dense<0.000000e+00> : vector<8x128xf32>
    %198 = tpu.matmul %182, %197, %cst_71 {dimension_numbers = #tpu.dot_dimension_numbers<[1], [0], [0], [1], [0, 0, 1, 1], [], []>} : vector<8x128xf32>, vector<128x128xf32>, vector<8x128xf32> -> vector<8x128xf32>
    %199 = vector.extract_strided_slice %198 {offsets = [0, 0], sizes = [1, 128], strides = [1, 1]} : vector<8x128xf32> to vector<1x128xf32>
    %200 = vector.extract_strided_slice %198 {offsets = [1, 0], sizes = [1, 128], strides = [1, 1]} : vector<8x128xf32> to vector<1x128xf32>
    %cst_72 = arith.constant 1.000000e-01 : f32
    %201 = vector.broadcast %cst_72 : f32 to vector<1x128xf32>
    %202 = arith.mulf %201, %185 : vector<1x128xf32>
    %cst_73 = arith.constant 1.562500e-02 : f32
    %203 = vector.broadcast %cst_73 : f32 to vector<1x128xf32>
    %204 = arith.mulf %199, %203 : vector<1x128xf32>
    %cst_74 = arith.constant 0.899999976 : f32
    %205 = vector.broadcast %cst_74 : f32 to vector<1x128xf32>
    %206 = arith.mulf %205, %204 : vector<1x128xf32>
    %207 = arith.addf %202, %206 : vector<1x128xf32>
    %cst_75 = arith.constant 1.000000e-01 : f32
    %208 = vector.broadcast %cst_75 : f32 to vector<1x128xf32>
    %209 = arith.mulf %208, %186 : vector<1x128xf32>
    %cst_76 = arith.constant 1.562500e-02 : f32
    %210 = vector.broadcast %cst_76 : f32 to vector<1x128xf32>
    %211 = arith.mulf %200, %210 : vector<1x128xf32>
    %cst_77 = arith.constant 0.899999976 : f32
    %212 = vector.broadcast %cst_77 : f32 to vector<1x128xf32>
    %213 = arith.mulf %212, %211 : vector<1x128xf32>
    %214 = arith.addf %209, %213 : vector<1x128xf32>
    %215 = arith.select %188, %207, %185 : vector<1x128xi1>, vector<1x128xf32>
    %216 = arith.select %188, %214, %186 : vector<1x128xi1>, vector<1x128xf32>
    %217 = arith.mulf %207, %207 : vector<1x128xf32>
    %cst_78 = arith.constant 1.000000e+00 : f32
    %218 = vector.broadcast %cst_78 : f32 to vector<1x128xf32>
    %219 = arith.select %188, %217, %218 : vector<1x128xi1>, vector<1x128xf32>
    %220 = arith.mulf %186, %199 : vector<1x128xf32>
    %221 = arith.mulf %185, %200 : vector<1x128xf32>
    %222 = arith.subf %220, %221 : vector<1x128xf32>
    %cst_79 = arith.constant 1.000000e-01 : f32
    %223 = vector.broadcast %cst_79 : f32 to vector<1x128xf32>
    %224 = arith.mulf %223, %222 : vector<1x128xf32>
    %225 = arith.divf %224, %219 : vector<1x128xf32>
    %226 = vector.shape_cast %183 : vector<1x128xf32> to vector<1x1x128xf32>
    %cst_80 = arith.constant dense<0.000000e+00> : vector<1xf32>
    %227 = vector.multi_reduction <add>, %226, %cst_80 [1, 2] : vector<1x1x128xf32> to vector<1xf32>
    %228 = vector.shape_cast %227 : vector<1xf32> to vector<1x1x1xf32>
    %229 = vector.extract %228[0, 0, 0] : f32 from vector<1x1x1xf32>
    %cst_81 = arith.constant 1.000000e+00 : f32
    %230 = arith.maximumf %229, %cst_81 : f32
    %cst_82 = arith.constant 6.400000e+01 : f32
    %231 = arith.mulf %230, %cst_82 : f32
    %cst_83 = arith.constant 1.000000e+00 : f32
    %232 = arith.divf %cst_83, %231 : f32
    %cst_84 = arith.constant 0.000000e+00 : f32
    %233 = vector.broadcast %cst_84 : f32 to vector<1x128xf32>
    %234 = arith.select %188, %225, %233 : vector<1x128xi1>, vector<1x128xf32>
    %235 = vector.broadcast %232 : f32 to vector<1x128xf32>
    %236 = arith.mulf %234, %235 : vector<1x128xf32>
    %237 = tpu.concatenate %236, %215, %216, %0 in 0 : vector<1x128xf32>, vector<1x128xf32>, vector<1x128xf32>, vector<5x128xf32> -> vector<8x128xf32>
    %c3_85 = arith.constant 3 : index
    %c0_86 = arith.constant 0 : index
    %c0_87 = arith.constant 0 : index
    %238 = vector.load %arg2[%c3_85, %c0_86, %c0_87] : memref<4x8x128xf32, #tpu.memory_space<vmem>>, vector<1x8x128xf32>
    %239 = vector.shape_cast %238 : vector<1x8x128xf32> to vector<8x128xf32>
    %240 = vector.shape_cast %237 : vector<8x128xf32> to vector<1x8x128xf32>
    tpu.vector_store %arg2[%c3_85, %c0_86, %c0_87], %240 {strides = array<i32>} : memref<4x8x128xf32, #tpu.memory_space<vmem>>, vector<1x8x128xf32>,
    return
  }
  func.func @transform_0(%arg0: i32) -> (i32, i32, i32) {
    %c0_i32 = arith.constant 0 : i32
    %c0_i32_0 = arith.constant 0 : i32
    %c0_i32_1 = arith.constant 0 : i32
    return %arg0, %c0_i32, %c0_i32_0 : i32, i32, i32
  }
  func.func @transform_1(%arg0: i32) -> (i32, i32, i32) {
    %c0_i32 = arith.constant 0 : i32
    %c0_i32_0 = arith.constant 0 : i32
    %c0_i32_1 = arith.constant 0 : i32
    return %arg0, %c0_i32, %c0_i32_0 : i32, i32, i32
  }
}

</mosaic_0001>

<llo_original>
// kernel: tpu_custom_call.1
$region0: #{tpu_custom_call.1}
  #allocation0 [shape = 'u32[]', space=smem, size = 0x4, offset = 0x4, fixed_abs, tag = 'smem constant byte address 0x4 - core index']
  #allocation1 [shape = 'u32[144,128]{1,0:T(1,128)}', space=vmem, size = 0x12000, scoped, tag = 'internal scratch']
  %s0 = inlined_call_operand.hbm [shape: f32[4,8,128], index: 0, kind: input, shape index: {}]
  %s1 = inlined_call_operand.hbm [shape: f32[4,8,128], index: 1, kind: output, shape index: {}]
  %s2 = sld [smem:[#allocation0]]
  $region18: #{tpu_custom_call.1} parent=0
    _
  %s4 = ssub.s32 1, %s2
  %s5 = scalar_select 0, %s4, %s2
  $region1: #{tpu_custom_call.1} parent=0
    #allocation2 [shape = 'u8[16384]{0}', space=vmem, size = 0x4000, scoped, tag = 'input window, operand 0, single buffered']
    #allocation3 [shape = 's32[1]{0}', space=sflag, size = 0x4, scoped, tag = 'scoped memory for tpu_custom_call.1']
    #allocation4 [shape = 's32[1]{0}', space=sflag, size = 0x4, scoped, tag = 'scoped memory for tpu_custom_call.1']
    #allocation5 [shape = 'u8[16384]{0}', space=vmem, size = 0x4000, scoped, tag = 'output window, operand 0, single buffered']
    %6 = vsyncpa [#allocation3], 0
    %7 = vsyncpa [#allocation4], 0
    // Predicated region
    $region2: #{tpu_custom_call.1} parent=1 // pred_check
      _
    $region3: #{tpu_custom_call.1} parent=1 // pred_check_branch
      %9 = sbr.rel (0) target = $region5
    $region4: #{tpu_custom_call.1} parent=1 // pred_region
      %s11 = ssub.s32 512, 512
      %12 = vsyncadd [#allocation3], %s11
      %s13 = sshll.u32 [#allocation2], 4
      %s14 = int_to_ptr.vmem [resolvable:$true] %s13
      %19 = dma.hbm_to_vmem [thread:$0]  %s0, 512, %s14, [#allocation3], 128, 128, 8
    $region5: #{tpu_custom_call.1} parent=1 // pred_fallthru
      _
    // Predicated region
    $region6: #{tpu_custom_call.1} parent=1 // pred_check
      _
    $region7: #{tpu_custom_call.1} parent=1 // pred_check_branch
      %21 = sbr.rel (0) target = $region9
    $region8: #{tpu_custom_call.1} parent=1 // pred_region
      %22 = dma.done [#allocation3], 512
    $region9: #{tpu_custom_call.1} parent=1 // pred_fallthru
      _
    %v23 = vld [vmem:[#allocation2] sm:$0xff]
    %vm24 = vcmp.gt.f32.partialorder %v23, 0.0
    %v26 = vrot.slane %v23, 2
    %28 = vxpose.xlu0.b32.start [1/16] %v26, 128
    %29 = vxpose.xlu0.b32.cont [2/16] 0.0, 128
    %30 = vxpose.xlu0.b32.cont [3/16] 0.0, 128
    %31 = vxpose.xlu0.b32.cont [4/16] 0.0, 128
    %32 = vxpose.xlu0.b32.cont [5/16] 0.0, 128
    %33 = vxpose.xlu0.b32.cont [6/16] 0.0, 128
    %34 = vxpose.xlu0.b32.cont [7/16] 0.0, 128
    %35 = vxpose.xlu0.b32.cont [8/16] 0.0, 128
    %36 = vxpose.xlu0.b32.cont [9/16] 0.0, 128
    %37 = vxpose.xlu0.b32.cont [10/16] 0.0, 128
    %38 = vxpose.xlu0.b32.cont [11/16] 0.0, 128
    %39 = vxpose.xlu0.b32.cont [12/16] 0.0, 128
    %40 = vxpose.xlu0.b32.cont [13/16] 0.0, 128
    %41 = vxpose.xlu0.b32.cont [14/16] 0.0, 128
    %42 = vxpose.xlu0.b32.cont [15/16] 0.0, 128
    %43 = vxpose.xlu0.b32.end [16/16] 0.0, 128
    %v44 = vpop.trf.xlu0
    %v45 = vpop.trf.xlu0
    %v46 = vpop.trf.xlu0
    %v47 = vpop.trf.xlu0
    %v48 = vpop.trf.xlu0
    %v49 = vpop.trf.xlu0
    %v50 = vpop.trf.xlu0
    %v51 = vpop.trf.xlu0
    %v52 = vpop.trf.xlu0
    %v53 = vpop.trf.xlu0
    %v54 = vpop.trf.xlu0
    %v55 = vpop.trf.xlu0
    %v56 = vpop.trf.xlu0
    %v57 = vpop.trf.xlu0
    %v58 = vpop.trf.xlu0
    %v59 = vpop.trf.xlu0
    %v60 = vlaneseq
    %v61 = vshrl.u32 %v60, 7
    %v62 = vsub.s32 2, %v61
    %v63 = vrot.slane %v23, %v62
    %65 = vset.pattern.permute.xlu0 0
    %66 = vperm.xlu0 %65, %v44
    %v67 = vpop.permute.xlu0 %66
    %70 = vset.pattern.permute.xlu0 0
    %71 = vperm.xlu0 %70, %v45
    %v72 = vpop.permute.xlu0 %71
    %75 = vset.pattern.permute.xlu0 0
    %76 = vperm.xlu0 %75, %v46
    %v77 = vpop.permute.xlu0 %76
    %80 = vset.pattern.permute.xlu0 0
    %81 = vperm.xlu0 %80, %v47
    %v82 = vpop.permute.xlu0 %81
    %85 = vset.pattern.permute.xlu0 0
    %86 = vperm.xlu0 %85, %v48
    %v87 = vpop.permute.xlu0 %86
    %90 = vset.pattern.permute.xlu0 0
    %91 = vperm.xlu0 %90, %v49
    %v92 = vpop.permute.xlu0 %91
    %95 = vset.pattern.permute.xlu0 0
    %96 = vperm.xlu0 %95, %v50
    %v97 = vpop.permute.xlu0 %96
    %100 = vset.pattern.permute.xlu0 0
    %101 = vperm.xlu0 %100, %v51
    %v102 = vpop.permute.xlu0 %101
    %105 = vset.pattern.permute.xlu0 0
    %106 = vperm.xlu0 %105, %v52
    %v107 = vpop.permute.xlu0 %106
    %110 = vset.pattern.permute.xlu0 0
    %111 = vperm.xlu0 %110, %v53
    %v112 = vpop.permute.xlu0 %111
    %115 = vset.pattern.permute.xlu0 0
    %116 = vperm.xlu0 %115, %v54
    %v117 = vpop.permute.xlu0 %116
    %120 = vset.pattern.permute.xlu0 0
    %121 = vperm.xlu0 %120, %v55
    %v122 = vpop.permute.xlu0 %121
    %125 = vset.pattern.permute.xlu0 0
    %126 = vperm.xlu0 %125, %v56
    %v127 = vpop.permute.xlu0 %126
    %130 = vset.pattern.permute.xlu0 0
    %131 = vperm.xlu0 %130, %v57
    %v132 = vpop.permute.xlu0 %131
    %135 = vset.pattern.permute.xlu0 0
    %136 = vperm.xlu0 %135, %v58
    %v137 = vpop.permute.xlu0 %136
    %140 = vset.pattern.permute.xlu0 0
    %141 = vperm.xlu0 %140, %v59
    %v142 = vpop.permute.xlu0 %141
    %v144 = vsub.f32 %v63, %v67
    %v145 = vsub.f32 %v63, %v72
    %v146 = vsub.f32 %v63, %v77
    %v147 = vsub.f32 %v63, %v82
    %v148 = vsub.f32 %v63, %v87
    %v149 = vsub.f32 %v63, %v92
    %v150 = vsub.f32 %v63, %v97
    %v151 = vsub.f32 %v63, %v102
    %v152 = vsub.f32 %v63, %v107
    %v153 = vsub.f32 %v63, %v112
    %v154 = vsub.f32 %v63, %v117
    %v155 = vsub.f32 %v63, %v122
    %v156 = vsub.f32 %v63, %v127
    %v157 = vsub.f32 %v63, %v132
    %v158 = vsub.f32 %v63, %v137
    %v159 = vsub.f32 %v63, %v142
    %v160 = vsub.f32 1.0, %v144
    %v161 = vsub.f32 1.0, %v145
    %v162 = vsub.f32 1.0, %v146
    %v163 = vsub.f32 1.0, %v147
    %v164 = vsub.f32 1.0, %v148
    %v165 = vsub.f32 1.0, %v149
    %v166 = vsub.f32 1.0, %v150
    %v167 = vsub.f32 1.0, %v151
    %v168 = vsub.f32 1.0, %v152
    %v169 = vsub.f32 1.0, %v153
    %v170 = vsub.f32 1.0, %v154
    %v171 = vsub.f32 1.0, %v155
    %v172 = vsub.f32 1.0, %v156
    %v173 = vsub.f32 1.0, %v157
    %v174 = vsub.f32 1.0, %v158
    %v175 = vsub.f32 1.0, %v159
    %v176 = vmax.f32 %v160, 0.0
    %v177 = vmax.f32 %v161, 0.0
    %v178 = vmax.f32 %v162, 0.0
    %v179 = vmax.f32 %v163, 0.0
    %v180 = vmax.f32 %v164, 0.0
    %v181 = vmax.f32 %v165, 0.0
    %v182 = vmax.f32 %v166, 0.0
    %v183 = vmax.f32 %v167, 0.0
    %v184 = vmax.f32 %v168, 0.0
    %v185 = vmax.f32 %v169, 0.0
    %v186 = vmax.f32 %v170, 0.0
    %v187 = vmax.f32 %v171, 0.0
    %v188 = vmax.f32 %v172, 0.0
    %v189 = vmax.f32 %v173, 0.0
    %v190 = vmax.f32 %v174, 0.0
    %v191 = vmax.f32 %v175, 0.0
    %v192 = vmul.f32 %v176, %v176
    %v193 = vmul.f32 %v177, %v177
    %v194 = vmul.f32 %v178, %v178
    %v195 = vmul.f32 %v179, %v179
    %v196 = vmul.f32 %v180, %v180
    %v197 = vmul.f32 %v181, %v181
    %v198 = vmul.f32 %v182, %v182
    %v199 = vmul.f32 %v183, %v183
    %v200 = vmul.f32 %v184, %v184
    %v201 = vmul.f32 %v185, %v185
    %v202 = vmul.f32 %v186, %v186
    %v203 = vmul.f32 %v187, %v187
    %v204 = vmul.f32 %v188, %v188
    %v205 = vmul.f32 %v189, %v189
    %v206 = vmul.f32 %v190, %v190
    %v207 = vmul.f32 %v191, %v191
    %208 = vmatprep.subr.mxu0 0.0
    %209 = vmatpush1.msra.mxu0 %v192
    %210 = vmatprep.subr.mxu0 0.0
    %211 = vmatpush1.msra.mxu0 %v193
    %212 = vmatprep.subr.mxu0 0.0
    %213 = vmatpush1.msra.mxu0 %v194
    %214 = vmatprep.subr.mxu0 0.0
    %215 = vmatpush1.msra.mxu0 %v195
    %216 = vmatprep.subr.mxu0 0.0
    %217 = vmatpush1.msra.mxu0 %v196
    %218 = vmatprep.subr.mxu0 0.0
    %219 = vmatpush1.msra.mxu0 %v197
    %220 = vmatprep.subr.mxu0 0.0
    %221 = vmatpush1.msra.mxu0 %v198
    %222 = vmatprep.subr.mxu0 0.0
    %223 = vmatpush1.msra.mxu0 %v199
    %224 = vmatprep.subr.mxu0 0.0
    %225 = vmatpush1.msra.mxu0 %v200
    %226 = vmatprep.subr.mxu0 0.0
    %227 = vmatpush1.msra.mxu0 %v201
    %228 = vmatprep.subr.mxu0 0.0
    %229 = vmatpush1.msra.mxu0 %v202
    %230 = vmatprep.subr.mxu0 0.0
    %231 = vmatpush1.msra.mxu0 %v203
    %232 = vmatprep.subr.mxu0 0.0
    %233 = vmatpush1.msra.mxu0 %v204
    %234 = vmatprep.subr.mxu0 0.0
    %235 = vmatpush1.msra.mxu0 %v205
    %236 = vmatprep.subr.mxu0 0.0
    %237 = vmatpush1.msra.mxu0 %v206
    %238 = vmatprep.subr.mxu0 0.0
    %239 = vmatpush1.msra.mxu0 %v207
    %240 = vmatprep.subr.mxu0 0.0
    %241 = vmatpush1.msra.mxu0 0.0
    %242 = vmatprep.subr.mxu0 0.0
    %243 = vmatpush1.msra.mxu0 0.0
    %244 = vmatprep.subr.mxu0 0.0
    %245 = vmatpush1.msra.mxu0 0.0
    %246 = vmatprep.subr.mxu0 0.0
    %247 = vmatpush1.msra.mxu0 0.0
    %248 = vmatprep.subr.mxu0 0.0
    %249 = vmatpush1.msra.mxu0 0.0
    %250 = vmatprep.subr.mxu0 0.0
    %251 = vmatpush1.msra.mxu0 0.0
    %252 = vmatprep.subr.mxu0 0.0
    %253 = vmatpush1.msra.mxu0 0.0
    %254 = vmatprep.subr.mxu0 0.0
    %255 = vmatpush1.msra.mxu0 0.0
    %256 = vmatprep.subr.mxu0 0.0
    %257 = vmatpush1.msra.mxu0 0.0
    %258 = vmatprep.subr.mxu0 0.0
    %259 = vmatpush1.msra.mxu0 0.0
    %260 = vmatprep.subr.mxu0 0.0
    %261 = vmatpush1.msra.mxu0 0.0
    %262 = vmatprep.subr.mxu0 0.0
    %263 = vmatpush1.msra.mxu0 0.0
    %264 = vmatprep.subr.mxu0 0.0
    %265 = vmatpush1.msra.mxu0 0.0
    %266 = vmatprep.subr.mxu0 0.0
    %267 = vmatpush1.msra.mxu0 0.0
    %268 = vmatprep.subr.mxu0 0.0
    %269 = vmatpush1.msra.mxu0 0.0
    %270 = vmatprep.subr.mxu0 0.0
    %271 = vmatpush1.msra.mxu0 0.0
    %272 = vmatprep.mubr.f32.mxu0 0.0
    %273 = vmatmul.mubr.f32.gmra.mrb[0].mxu0 %v23
    %v274 = vpop.f32.mrb[0].mxu0
    %v275 = vadd.f32 0.0, %v274
    %v276 = vpop.f32.mrb[0].mxu0
    %277 = vdwg.mxu0
    %v278 = vmul.f32 %v23, 0.1
    %v279 = vmul.f32 %v275, 0.015625
    %v280 = vmul.f32 %v279, 0.9
    %v282 = vrot.slane %v280, 5
    %v284 = vadd.f32 %v278, %v282
    %v286 = vrot.slane %v284, 2
    %v288 = vsel %vm24, %v286, %v26
    %v289 = vrot.slane %v284, 3
    %v291 = vrot.slane %v23, 3
    %v293 = vsel %vm24, %v289, %v291
    %v294 = vmul.f32 %v284, %v284
    %v296 = vrot.slane %v294, 2
    %v298 = vsel %vm24, %v296, 1.0
    %v300 = vrot.slane %v275, 4
    %v302 = vmul.f32 %v23, %v300
    %v303 = vrot.slane %v275, 6
    %v305 = vmul.f32 %v23, %v303
    %v307 = vrot.slane %v305, 7
    %v309 = vsub.f32 %v302, %v307
    %v310 = vmul.f32 %v309, 0.1
    %v312 = vrot.slane %v298, 5
    %v314 = vrcp.pop %v312
    %v315 = vmul.f32 %v310, %v314
    %v316 = vrot.slane %v23, 1
    %vm318 = vcmask 1040384
    %v319 = vsel %vm318, %v316, 0.0
    %320 = vadd.xlane.f32.xlu0 %v319
    %v321 = vpop.xlane.xlu0 %320
    %v322 = vrot.slane %v321, 4
    %v323 = vadd.f32 %v321, %v322
    %v324 = vrot.slane %v323, 2
    %v325 = vadd.f32 %v323, %v324
    %v326 = vrot.slane %v325, 1
    %v327 = vadd.f32 %v325, %v326
    %s328 = vtos %v327
    %s329 = smax.f32 %s328, 1.0
    %s330 = smul.f32 %s329, 64.0
    %v331 = vstv %s330
    %v332 = vrcp.pop %v331
    %s333 = vtos %v332
    %v335 = vrot.slane %v315, 3
    %v337 = vsel %vm24, %v335, 0.0
    %v338 = vstv %s333
    %v339 = vmul.f32 %v337, %v338
    %v341 = vrot.slane %v339, 1
    %v344 = vrot.slane %v293, 7
    %v346 = vsel %vm318, %v341, %v288
    %vm347 = vcmask 1041408
    %v348 = vsel %vm347, %v346, %v344
    %vm349 = vcmask 1042432
    %v350 = vsel %vm349, %v348, 0.0
    %351 = vst [vmem:[#allocation5] sm:$0xff] %v350
    %s352 = scalar_lea.vmem [#allocation2], 8
    %v353 = vld [vmem:[%s352] sm:$0xff]
    %vm354 = vcmp.gt.f32.partialorder %v353, 0.0
    %v356 = vrot.slane %v353, 2
    %358 = vxpose.xlu0.b32.start [1/16] %v356, 128
    %359 = vxpose.xlu0.b32.cont [2/16] 0.0, 128
    %360 = vxpose.xlu0.b32.cont [3/16] 0.0, 128
    %361 = vxpose.xlu0.b32.cont [4/16] 0.0, 128
    %362 = vxpose.xlu0.b32.cont [5/16] 0.0, 128
    %363 = vxpose.xlu0.b32.cont [6/16] 0.0, 128
    %364 = vxpose.xlu0.b32.cont [7/16] 0.0, 128
    %365 = vxpose.xlu0.b32.cont [8/16] 0.0, 128
    %366 = vxpose.xlu0.b32.cont [9/16] 0.0, 128
    %367 = vxpose.xlu0.b32.cont [10/16] 0.0, 128
    %368 = vxpose.xlu0.b32.cont [11/16] 0.0, 128
    %369 = vxpose.xlu0.b32.cont [12/16] 0.0, 128
    %370 = vxpose.xlu0.b32.cont [13/16] 0.0, 128
    %371 = vxpose.xlu0.b32.cont [14/16] 0.0, 128
    %372 = vxpose.xlu0.b32.cont [15/16] 0.0, 128
    %373 = vxpose.xlu0.b32.end [16/16] 0.0, 128
    %v374 = vpop.trf.xlu0
    %v375 = vpop.trf.xlu0
    %v376 = vpop.trf.xlu0
    %v377 = vpop.trf.xlu0
    %v378 = vpop.trf.xlu0
    %v379 = vpop.trf.xlu0
    %v380 = vpop.trf.xlu0
    %v381 = vpop.trf.xlu0
    %v382 = vpop.trf.xlu0
    %v383 = vpop.trf.xlu0
    %v384 = vpop.trf.xlu0
    %v385 = vpop.trf.xlu0
    %v386 = vpop.trf.xlu0
    %v387 = vpop.trf.xlu0
    %v388 = vpop.trf.xlu0
    %v389 = vpop.trf.xlu0
    %v390 = vlaneseq
    %v391 = vshrl.u32 %v390, 7
    %v392 = vsub.s32 2, %v391
    %v393 = vrot.slane %v353, %v392
    %395 = vset.pattern.permute.xlu0 0
    %396 = vperm.xlu0 %395, %v374
    %v397 = vpop.permute.xlu0 %396
    %400 = vset.pattern.permute.xlu0 0
    %401 = vperm.xlu0 %400, %v375
    %v402 = vpop.permute.xlu0 %401
    %405 = vset.pattern.permute.xlu0 0
    %406 = vperm.xlu0 %405, %v376
    %v407 = vpop.permute.xlu0 %406
    %410 = vset.pattern.permute.xlu0 0
    %411 = vperm.xlu0 %410, %v377
    %v412 = vpop.permute.xlu0 %411
    %415 = vset.pattern.permute.xlu0 0
    %416 = vperm.xlu0 %415, %v378
    %v417 = vpop.permute.xlu0 %416
    %420 = vset.pattern.permute.xlu0 0
    %421 = vperm.xlu0 %420, %v379
    %v422 = vpop.permute.xlu0 %421
    %425 = vset.pattern.permute.xlu0 0
    %426 = vperm.xlu0 %425, %v380
    %v427 = vpop.permute.xlu0 %426
    %430 = vset.pattern.permute.xlu0 0
    %431 = vperm.xlu0 %430, %v381
    %v432 = vpop.permute.xlu0 %431
    %435 = vset.pattern.permute.xlu0 0
    %436 = vperm.xlu0 %435, %v382
    %v437 = vpop.permute.xlu0 %436
    %440 = vset.pattern.permute.xlu0 0
    %441 = vperm.xlu0 %440, %v383
    %v442 = vpop.permute.xlu0 %441
    %445 = vset.pattern.permute.xlu0 0
    %446 = vperm.xlu0 %445, %v384
    %v447 = vpop.permute.xlu0 %446
    %450 = vset.pattern.permute.xlu0 0
    %451 = vperm.xlu0 %450, %v385
    %v452 = vpop.permute.xlu0 %451
    %455 = vset.pattern.permute.xlu0 0
    %456 = vperm.xlu0 %455, %v386
    %v457 = vpop.permute.xlu0 %456
    %460 = vset.pattern.permute.xlu0 0
    %461 = vperm.xlu0 %460, %v387
    %v462 = vpop.permute.xlu0 %461
    %465 = vset.pattern.permute.xlu0 0
    %466 = vperm.xlu0 %465, %v388
    %v467 = vpop.permute.xlu0 %466
    %470 = vset.pattern.permute.xlu0 0
    %471 = vperm.xlu0 %470, %v389
    %v472 = vpop.permute.xlu0 %471
    %v474 = vsub.f32 %v393, %v397
    %v475 = vsub.f32 %v393, %v402
    %v476 = vsub.f32 %v393, %v407
    %v477 = vsub.f32 %v393, %v412
    %v478 = vsub.f32 %v393, %v417
    %v479 = vsub.f32 %v393, %v422
    %v480 = vsub.f32 %v393, %v427
    %v481 = vsub.f32 %v393, %v432
    %v482 = vsub.f32 %v393, %v437
    %v483 = vsub.f32 %v393, %v442
    %v484 = vsub.f32 %v393, %v447
    %v485 = vsub.f32 %v393, %v452
    %v486 = vsub.f32 %v393, %v457
    %v487 = vsub.f32 %v393, %v462
    %v488 = vsub.f32 %v393, %v467
    %v489 = vsub.f32 %v393, %v472
    %v490 = vsub.f32 1.0, %v474
    %v491 = vsub.f32 1.0, %v475
    %v492 = vsub.f32 1.0, %v476
    %v493 = vsub.f32 1.0, %v477
    %v494 = vsub.f32 1.0, %v478
    %v495 = vsub.f32 1.0, %v479
    %v496 = vsub.f32 1.0, %v480
    %v497 = vsub.f32 1.0, %v481
    %v498 = vsub.f32 1.0, %v482
    %v499 = vsub.f32 1.0, %v483
    %v500 = vsub.f32 1.0, %v484
    %v501 = vsub.f32 1.0, %v485
    %v502 = vsub.f32 1.0, %v486
    %v503 = vsub.f32 1.0, %v487
    %v504 = vsub.f32 1.0, %v488
    %v505 = vsub.f32 1.0, %v489
    %v506 = vmax.f32 %v490, 0.0
    %v507 = vmax.f32 %v491, 0.0
    %v508 = vmax.f32 %v492, 0.0
    %v509 = vmax.f32 %v493, 0.0
    %v510 = vmax.f32 %v494, 0.0
    %v511 = vmax.f32 %v495, 0.0
    %v512 = vmax.f32 %v496, 0.0
    %v513 = vmax.f32 %v497, 0.0
    %v514 = vmax.f32 %v498, 0.0
    %v515 = vmax.f32 %v499, 0.0
    %v516 = vmax.f32 %v500, 0.0
    %v517 = vmax.f32 %v501, 0.0
    %v518 = vmax.f32 %v502, 0.0
    %v519 = vmax.f32 %v503, 0.0
    %v520 = vmax.f32 %v504, 0.0
    %v521 = vmax.f32 %v505, 0.0
    %v522 = vmul.f32 %v506, %v506
    %v523 = vmul.f32 %v507, %v507
    %v524 = vmul.f32 %v508, %v508
    %v525 = vmul.f32 %v509, %v509
    %v526 = vmul.f32 %v510, %v510
    %v527 = vmul.f32 %v511, %v511
    %v528 = vmul.f32 %v512, %v512
    %v529 = vmul.f32 %v513, %v513
    %v530 = vmul.f32 %v514, %v514
    %v531 = vmul.f32 %v515, %v515
    %v532 = vmul.f32 %v516, %v516
    %v533 = vmul.f32 %v517, %v517
    %v534 = vmul.f32 %v518, %v518
    %v535 = vmul.f32 %v519, %v519
    %v536 = vmul.f32 %v520, %v520
    %v537 = vmul.f32 %v521, %v521
    %538 = vmatprep.subr.mxu0 0.0
    %539 = vmatpush1.msra.mxu0 %v522
    %540 = vmatprep.subr.mxu0 0.0
    %541 = vmatpush1.msra.mxu0 %v523
    %542 = vmatprep.subr.mxu0 0.0
    %543 = vmatpush1.msra.mxu0 %v524
    %544 = vmatprep.subr.mxu0 0.0
    %545 = vmatpush1.msra.mxu0 %v525
    %546 = vmatprep.subr.mxu0 0.0
    %547 = vmatpush1.msra.mxu0 %v526
    %548 = vmatprep.subr.mxu0 0.0
    %549 = vmatpush1.msra.mxu0 %v527
    %550 = vmatprep.subr.mxu0 0.0
    %551 = vmatpush1.msra.mxu0 %v528
    %552 = vmatprep.subr.mxu0 0.0
    %553 = vmatpush1.msra.mxu0 %v529
    %554 = vmatprep.subr.mxu0 0.0
    %555 = vmatpush1.msra.mxu0 %v530
    %556 = vmatprep.subr.mxu0 0.0
    %557 = vmatpush1.msra.mxu0 %v531
    %558 = vmatprep.subr.mxu0 0.0
    %559 = vmatpush1.msra.mxu0 %v532
    %560 = vmatprep.subr.mxu0 0.0
    %561 = vmatpush1.msra.mxu0 %v533
    %562 = vmatprep.subr.mxu0 0.0
    %563 = vmatpush1.msra.mxu0 %v534
    %564 = vmatprep.subr.mxu0 0.0
    %565 = vmatpush1.msra.mxu0 %v535
    %566 = vmatprep.subr.mxu0 0.0
    %567 = vmatpush1.msra.mxu0 %v536
    %568 = vmatprep.subr.mxu0 0.0
    %569 = vmatpush1.msra.mxu0 %v537
    %570 = vmatprep.subr.mxu0 0.0
    %571 = vmatpush1.msra.mxu0 0.0
    %572 = vmatprep.subr.mxu0 0.0
    %573 = vmatpush1.msra.mxu0 0.0
    %574 = vmatprep.subr.mxu0 0.0
    %575 = vmatpush1.msra.mxu0 0.0
    %576 = vmatprep.subr.mxu0 0.0
    %577 = vmatpush1.msra.mxu0 0.0
    %578 = vmatprep.subr.mxu0 0.0
    %579 = vmatpush1.msra.mxu0 0.0
    %580 = vmatprep.subr.mxu0 0.0
    %581 = vmatpush1.msra.mxu0 0.0
    %582 = vmatprep.subr.mxu0 0.0
    %583 = vmatpush1.msra.mxu0 0.0
    %584 = vmatprep.subr.mxu0 0.0
    %585 = vmatpush1.msra.mxu0 0.0
    %586 = vmatprep.subr.mxu0 0.0
    %587 = vmatpush1.msra.mxu0 0.0
    %588 = vmatprep.subr.mxu0 0.0
    %589 = vmatpush1.msra.mxu0 0.0
    %590 = vmatprep.subr.mxu0 0.0
    %591 = vmatpush1.msra.mxu0 0.0
    %592 = vmatprep.subr.mxu0 0.0
    %593 = vmatpush1.msra.mxu0 0.0
    %594 = vmatprep.subr.mxu0 0.0
    %595 = vmatpush1.msra.mxu0 0.0
    %596 = vmatprep.subr.mxu0 0.0
    %597 = vmatpush1.msra.mxu0 0.0
    %598 = vmatprep.subr.mxu0 0.0
    %599 = vmatpush1.msra.mxu0 0.0
    %600 = vmatprep.subr.mxu0 0.0
    %601 = vmatpush1.msra.mxu0 0.0
    %602 = vmatprep.mubr.f32.mxu0 0.0
    %603 = vmatmul.mubr.f32.gmra.mrb[0].mxu0 %v353
    %v604 = vpop.f32.mrb[0].mxu0
    %v605 = vadd.f32 0.0, %v604
    %v606 = vpop.f32.mrb[0].mxu0
    %607 = vdwg.mxu0
    %v608 = vmul.f32 %v353, 0.1
    %v609 = vmul.f32 %v605, 0.015625
    %v610 = vmul.f32 %v609, 0.9
    %v612 = vrot.slane %v610, 5
    %v614 = vadd.f32 %v608, %v612
    %v616 = vrot.slane %v614, 2
    %v618 = vsel %vm354, %v616, %v356
    %v619 = vrot.slane %v614, 3
    %v621 = vrot.slane %v353, 3
    %v623 = vsel %vm354, %v619, %v621
    %v624 = vmul.f32 %v614, %v614
    %v626 = vrot.slane %v624, 2
    %v628 = vsel %vm354, %v626, 1.0
    %v630 = vrot.slane %v605, 4
    %v632 = vmul.f32 %v353, %v630
    %v633 = vrot.slane %v605, 6
    %v635 = vmul.f32 %v353, %v633
    %v637 = vrot.slane %v635, 7
    %v639 = vsub.f32 %v632, %v637
    %v640 = vmul.f32 %v639, 0.1
    %v642 = vrot.slane %v628, 5
    %v644 = vrcp.pop %v642
    %v645 = vmul.f32 %v640, %v644
    %v646 = vrot.slane %v353, 1
    %v648 = vsel %vm318, %v646, 0.0
    %649 = vadd.xlane.f32.xlu0 %v648
    %v650 = vpop.xlane.xlu0 %649
    %v651 = vrot.slane %v650, 4
    %v652 = vadd.f32 %v650, %v651
    %v653 = vrot.slane %v652, 2
    %v654 = vadd.f32 %v652, %v653
    %v655 = vrot.slane %v654, 1
    %v656 = vadd.f32 %v654, %v655
    %s657 = vtos %v656
    %s658 = smax.f32 %s657, 1.0
    %s659 = smul.f32 %s658, 64.0
    %v660 = vstv %s659
    %v661 = vrcp.pop %v660
    %s662 = vtos %v661
    %v664 = vrot.slane %v645, 3
    %v666 = vsel %vm354, %v664, 0.0
    %v667 = vstv %s662
    %v668 = vmul.f32 %v666, %v667
    %v670 = vrot.slane %v668, 1
    %v673 = vrot.slane %v623, 7
    %v675 = vsel %vm318, %v670, %v618
    %v676 = vsel %vm347, %v675, %v673
    %v677 = vsel %vm349, %v676, 0.0
    %s678 = scalar_lea.vmem [#allocation5], 8
    %679 = vst [vmem:[%s678] sm:$0xff] %v677
    %s680 = scalar_lea.vmem [#allocation2], 16
    %v681 = vld [vmem:[%s680] sm:$0xff]
    %vm682 = vcmp.gt.f32.partialorder %v681, 0.0
    %v684 = vrot.slane %v681, 2
    %686 = vxpose.xlu0.b32.start [1/16] %v684, 128
    %687 = vxpose.xlu0.b32.cont [2/16] 0.0, 128
    %688 = vxpose.xlu0.b32.cont [3/16] 0.0, 128
    %689 = vxpose.xlu0.b32.cont [4/16] 0.0, 128
    %690 = vxpose.xlu0.b32.cont [5/16] 0.0, 128
    %691 = vxpose.xlu0.b32.cont [6/16] 0.0, 128
    %692 = vxpose.xlu0.b32.cont [7/16] 0.0, 128
    %693 = vxpose.xlu0.b32.cont [8/16] 0.0, 128
    %694 = vxpose.xlu0.b32.cont [9/16] 0.0, 128
    %695 = vxpose.xlu0.b32.cont [10/16] 0.0, 128
    %696 = vxpose.xlu0.b32.cont [11/16] 0.0, 128
    %697 = vxpose.xlu0.b32.cont [12/16] 0.0, 128
    %698 = vxpose.xlu0.b32.cont [13/16] 0.0, 128
    %699 = vxpose.xlu0.b32.cont [14/16] 0.0, 128
    %700 = vxpose.xlu0.b32.cont [15/16] 0.0, 128
    %701 = vxpose.xlu0.b32.end [16/16] 0.0, 128
    %v702 = vpop.trf.xlu0
    %v703 = vpop.trf.xlu0
    %v704 = vpop.trf.xlu0
    %v705 = vpop.trf.xlu0
    %v706 = vpop.trf.xlu0
    %v707 = vpop.trf.xlu0
    %v708 = vpop.trf.xlu0
    %v709 = vpop.trf.xlu0
    %v710 = vpop.trf.xlu0
    %v711 = vpop.trf.xlu0
    %v712 = vpop.trf.xlu0
    %v713 = vpop.trf.xlu0
    %v714 = vpop.trf.xlu0
    %v715 = vpop.trf.xlu0
    %v716 = vpop.trf.xlu0
    %v717 = vpop.trf.xlu0
    %v718 = vlaneseq
    %v719 = vshrl.u32 %v718, 7
    %v720 = vsub.s32 2, %v719
    %v721 = vrot.slane %v681, %v720
    %723 = vset.pattern.permute.xlu0 0
    %724 = vperm.xlu0 %723, %v702
    %v725 = vpop.permute.xlu0 %724
    %728 = vset.pattern.permute.xlu0 0
    %729 = vperm.xlu0 %728, %v703
    %v730 = vpop.permute.xlu0 %729
    %733 = vset.pattern.permute.xlu0 0
    %734 = vperm.xlu0 %733, %v704
    %v735 = vpop.permute.xlu0 %734
    %738 = vset.pattern.permute.xlu0 0
    %739 = vperm.xlu0 %738, %v705
    %v740 = vpop.permute.xlu0 %739
    %743 = vset.pattern.permute.xlu0 0
    %744 = vperm.xlu0 %743, %v706
    %v745 = vpop.permute.xlu0 %744
    %748 = vset.pattern.permute.xlu0 0
    %749 = vperm.xlu0 %748, %v707
    %v750 = vpop.permute.xlu0 %749
    %753 = vset.pattern.permute.xlu0 0
    %754 = vperm.xlu0 %753, %v708
    %v755 = vpop.permute.xlu0 %754
    %758 = vset.pattern.permute.xlu0 0
    %759 = vperm.xlu0 %758, %v709
    %v760 = vpop.permute.xlu0 %759
    %763 = vset.pattern.permute.xlu0 0
    %764 = vperm.xlu0 %763, %v710
    %v765 = vpop.permute.xlu0 %764
    %768 = vset.pattern.permute.xlu0 0
    %769 = vperm.xlu0 %768, %v711
    %v770 = vpop.permute.xlu0 %769
    %773 = vset.pattern.permute.xlu0 0
    %774 = vperm.xlu0 %773, %v712
    %v775 = vpop.permute.xlu0 %774
    %778 = vset.pattern.permute.xlu0 0
    %779 = vperm.xlu0 %778, %v713
    %v780 = vpop.permute.xlu0 %779
    %783 = vset.pattern.permute.xlu0 0
    %784 = vperm.xlu0 %783, %v714
    %v785 = vpop.permute.xlu0 %784
    %788 = vset.pattern.permute.xlu0 0
    %789 = vperm.xlu0 %788, %v715
    %v790 = vpop.permute.xlu0 %789
    %793 = vset.pattern.permute.xlu0 0
    %794 = vperm.xlu0 %793, %v716
    %v795 = vpop.permute.xlu0 %794
    %798 = vset.pattern.permute.xlu0 0
    %799 = vperm.xlu0 %798, %v717
    %v800 = vpop.permute.xlu0 %799
    %v802 = vsub.f32 %v721, %v725
    %v803 = vsub.f32 %v721, %v730
    %v804 = vsub.f32 %v721, %v735
    %v805 = vsub.f32 %v721, %v740
    %v806 = vsub.f32 %v721, %v745
    %v807 = vsub.f32 %v721, %v750
    %v808 = vsub.f32 %v721, %v755
    %v809 = vsub.f32 %v721, %v760
    %v810 = vsub.f32 %v721, %v765
    %v811 = vsub.f32 %v721, %v770
    %v812 = vsub.f32 %v721, %v775
    %v813 = vsub.f32 %v721, %v780
    %v814 = vsub.f32 %v721, %v785
    %v815 = vsub.f32 %v721, %v790
    %v816 = vsub.f32 %v721, %v795
    %v817 = vsub.f32 %v721, %v800
    %v818 = vsub.f32 1.0, %v802
    %v819 = vsub.f32 1.0, %v803
    %v820 = vsub.f32 1.0, %v804
    %v821 = vsub.f32 1.0, %v805
    %v822 = vsub.f32 1.0, %v806
    %v823 = vsub.f32 1.0, %v807
    %v824 = vsub.f32 1.0, %v808
    %v825 = vsub.f32 1.0, %v809
    %v826 = vsub.f32 1.0, %v810
    %v827 = vsub.f32 1.0, %v811
    %v828 = vsub.f32 1.0, %v812
    %v829 = vsub.f32 1.0, %v813
    %v830 = vsub.f32 1.0, %v814
    %v831 = vsub.f32 1.0, %v815
    %v832 = vsub.f32 1.0, %v816
    %v833 = vsub.f32 1.0, %v817
    %v834 = vmax.f32 %v818, 0.0
    %v835 = vmax.f32 %v819, 0.0
    %v836 = vmax.f32 %v820, 0.0
    %v837 = vmax.f32 %v821, 0.0
    %v838 = vmax.f32 %v822, 0.0
    %v839 = vmax.f32 %v823, 0.0
    %v840 = vmax.f32 %v824, 0.0
    %v841 = vmax.f32 %v825, 0.0
    %v842 = vmax.f32 %v826, 0.0
    %v843 = vmax.f32 %v827, 0.0
    %v844 = vmax.f32 %v828, 0.0
    %v845 = vmax.f32 %v829, 0.0
    %v846 = vmax.f32 %v830, 0.0
    %v847 = vmax.f32 %v831, 0.0
    %v848 = vmax.f32 %v832, 0.0
    %v849 = vmax.f32 %v833, 0.0
    %v850 = vmul.f32 %v834, %v834
    %v851 = vmul.f32 %v835, %v835
    %v852 = vmul.f32 %v836, %v836
    %v853 = vmul.f32 %v837, %v837
    %v854 = vmul.f32 %v838, %v838
    %v855 = vmul.f32 %v839, %v839
    %v856 = vmul.f32 %v840, %v840
    %v857 = vmul.f32 %v841, %v841
    %v858 = vmul.f32 %v842, %v842
    %v859 = vmul.f32 %v843, %v843
    %v860 = vmul.f32 %v844, %v844
    %v861 = vmul.f32 %v845, %v845
    %v862 = vmul.f32 %v846, %v846
    %v863 = vmul.f32 %v847, %v847
    %v864 = vmul.f32 %v848, %v848
    %v865 = vmul.f32 %v849, %v849
    %866 = vmatprep.subr.mxu0 0.0
    %867 = vmatpush1.msra.mxu0 %v850
    %868 = vmatprep.subr.mxu0 0.0
    %869 = vmatpush1.msra.mxu0 %v851
    %870 = vmatprep.subr.mxu0 0.0
    %871 = vmatpush1.msra.mxu0 %v852
    %872 = vmatprep.subr.mxu0 0.0
    %873 = vmatpush1.msra.mxu0 %v853
    %874 = vmatprep.subr.mxu0 0.0
    %875 = vmatpush1.msra.mxu0 %v854
    %876 = vmatprep.subr.mxu0 0.0
    %877 = vmatpush1.msra.mxu0 %v855
    %878 = vmatprep.subr.mxu0 0.0
    %879 = vmatpush1.msra.mxu0 %v856
    %880 = vmatprep.subr.mxu0 0.0
    %881 = vmatpush1.msra.mxu0 %v857
    %882 = vmatprep.subr.mxu0 0.0
    %883 = vmatpush1.msra.mxu0 %v858
    %884 = vmatprep.subr.mxu0 0.0
    %885 = vmatpush1.msra.mxu0 %v859
    %886 = vmatprep.subr.mxu0 0.0
    %887 = vmatpush1.msra.mxu0 %v860
    %888 = vmatprep.subr.mxu0 0.0
    %889 = vmatpush1.msra.mxu0 %v861
    %890 = vmatprep.subr.mxu0 0.0
    %891 = vmatpush1.msra.mxu0 %v862
    %892 = vmatprep.subr.mxu0 0.0
    %893 = vmatpush1.msra.mxu0 %v863
    %894 = vmatprep.subr.mxu0 0.0
    %895 = vmatpush1.msra.mxu0 %v864
    %896 = vmatprep.subr.mxu0 0.0
    %897 = vmatpush1.msra.mxu0 %v865
    %898 = vmatprep.subr.mxu0 0.0
    %899 = vmatpush1.msra.mxu0 0.0
    %900 = vmatprep.subr.mxu0 0.0
    %901 = vmatpush1.msra.mxu0 0.0
    %902 = vmatprep.subr.mxu0 0.0
    %903 = vmatpush1.msra.mxu0 0.0
    %904 = vmatprep.subr.mxu0 0.0
    %905 = vmatpush1.msra.mxu0 0.0
    %906 = vmatprep.subr.mxu0 0.0
    %907 = vmatpush1.msra.mxu0 0.0
    %908 = vmatprep.subr.mxu0 0.0
    %909 = vmatpush1.msra.mxu0 0.0
    %910 = vmatprep.subr.mxu0 0.0
    %911 = vmatpush1.msra.mxu0 0.0
    %912 = vmatprep.subr.mxu0 0.0
    %913 = vmatpush1.msra.mxu0 0.0
    %914 = vmatprep.subr.mxu0 0.0
    %915 = vmatpush1.msra.mxu0 0.0
    %916 = vmatprep.subr.mxu0 0.0
    %917 = vmatpush1.msra.mxu0 0.0
    %918 = vmatprep.subr.mxu0 0.0
    %919 = vmatpush1.msra.mxu0 0.0
    %920 = vmatprep.subr.mxu0 0.0
    %921 = vmatpush1.msra.mxu0 0.0
    %922 = vmatprep.subr.mxu0 0.0
    %923 = vmatpush1.msra.mxu0 0.0
    %924 = vmatprep.subr.mxu0 0.0
    %925 = vmatpush1.msra.mxu0 0.0
    %926 = vmatprep.subr.mxu0 0.0
    %927 = vmatpush1.msra.mxu0 0.0
    %928 = vmatprep.subr.mxu0 0.0
    %929 = vmatpush1.msra.mxu0 0.0
    %930 = vmatprep.mubr.f32.mxu0 0.0
    %931 = vmatmul.mubr.f32.gmra.mrb[0].mxu0 %v681
    %v932 = vpop.f32.mrb[0].mxu0
    %v933 = vadd.f32 0.0, %v932
    %v934 = vpop.f32.mrb[0].mxu0
    %935 = vdwg.mxu0
    %v936 = vmul.f32 %v681, 0.1
    %v937 = vmul.f32 %v933, 0.015625
    %v938 = vmul.f32 %v937, 0.9
    %v940 = vrot.slane %v938, 5
    %v942 = vadd.f32 %v936, %v940
    %v944 = vrot.slane %v942, 2
    %v946 = vsel %vm682, %v944, %v684
    %v947 = vrot.slane %v942, 3
    %v949 = vrot.slane %v681, 3
    %v951 = vsel %vm682, %v947, %v949
    %v952 = vmul.f32 %v942, %v942
    %v954 = vrot.slane %v952, 2
    %v956 = vsel %vm682, %v954, 1.0
    %v958 = vrot.slane %v933, 4
    %v960 = vmul.f32 %v681, %v958
    %v961 = vrot.slane %v933, 6
    %v963 = vmul.f32 %v681, %v961
    %v965 = vrot.slane %v963, 7
    %v967 = vsub.f32 %v960, %v965
    %v968 = vmul.f32 %v967, 0.1
    %v970 = vrot.slane %v956, 5
    %v972 = vrcp.pop %v970
    %v973 = vmul.f32 %v968, %v972
    %v974 = vrot.slane %v681, 1
    %v976 = vsel %vm318, %v974, 0.0
    %977 = vadd.xlane.f32.xlu0 %v976
    %v978 = vpop.xlane.xlu0 %977
    %v979 = vrot.slane %v978, 4
    %v980 = vadd.f32 %v978, %v979
    %v981 = vrot.slane %v980, 2
    %v982 = vadd.f32 %v980, %v981
    %v983 = vrot.slane %v982, 1
    %v984 = vadd.f32 %v982, %v983
    %s985 = vtos %v984
    %s986 = smax.f32 %s985, 1.0
    %s987 = smul.f32 %s986, 64.0
    %v988 = vstv %s987
    %v989 = vrcp.pop %v988
    %s990 = vtos %v989
    %v992 = vrot.slane %v973, 3
    %v994 = vsel %vm682, %v992, 0.0
    %v995 = vstv %s990
    %v996 = vmul.f32 %v994, %v995
    %v998 = vrot.slane %v996, 1
    %v1001 = vrot.slane %v951, 7
    %v1003 = vsel %vm318, %v998, %v946
    %v1004 = vsel %vm347, %v1003, %v1001
    %v1005 = vsel %vm349, %v1004, 0.0
    %s1006 = scalar_lea.vmem [#allocation5], 16
    %1007 = vst [vmem:[%s1006] sm:$0xff] %v1005
    %s1008 = scalar_lea.vmem [#allocation2], 24
    %v1009 = vld [vmem:[%s1008] sm:$0xff]
    %vm1010 = vcmp.gt.f32.partialorder %v1009, 0.0
    %v1012 = vrot.slane %v1009, 2
    %1014 = vxpose.xlu0.b32.start [1/16] %v1012, 128
    %1015 = vxpose.xlu0.b32.cont [2/16] 0.0, 128
    %1016 = vxpose.xlu0.b32.cont [3/16] 0.0, 128
    %1017 = vxpose.xlu0.b32.cont [4/16] 0.0, 128
    %1018 = vxpose.xlu0.b32.cont [5/16] 0.0, 128
    %1019 = vxpose.xlu0.b32.cont [6/16] 0.0, 128
    %1020 = vxpose.xlu0.b32.cont [7/16] 0.0, 128
    %1021 = vxpose.xlu0.b32.cont [8/16] 0.0, 128
    %1022 = vxpose.xlu0.b32.cont [9/16] 0.0, 128
    %1023 = vxpose.xlu0.b32.cont [10/16] 0.0, 128
    %1024 = vxpose.xlu0.b32.cont [11/16] 0.0, 128
    %1025 = vxpose.xlu0.b32.cont [12/16] 0.0, 128
    %1026 = vxpose.xlu0.b32.cont [13/16] 0.0, 128
    %1027 = vxpose.xlu0.b32.cont [14/16] 0.0, 128
    %1028 = vxpose.xlu0.b32.cont [15/16] 0.0, 128
    %1029 = vxpose.xlu0.b32.end [16/16] 0.0, 128
    %v1030 = vpop.trf.xlu0
    %v1031 = vpop.trf.xlu0
    %v1032 = vpop.trf.xlu0
    %v1033 = vpop.trf.xlu0
    %v1034 = vpop.trf.xlu0
    %v1035 = vpop.trf.xlu0
    %v1036 = vpop.trf.xlu0
    %v1037 = vpop.trf.xlu0
    %v1038 = vpop.trf.xlu0
    %v1039 = vpop.trf.xlu0
    %v1040 = vpop.trf.xlu0
    %v1041 = vpop.trf.xlu0
    %v1042 = vpop.trf.xlu0
    %v1043 = vpop.trf.xlu0
    %v1044 = vpop.trf.xlu0
    %v1045 = vpop.trf.xlu0
    %v1046 = vlaneseq
    %v1047 = vshrl.u32 %v1046, 7
    %v1048 = vsub.s32 2, %v1047
    %v1049 = vrot.slane %v1009, %v1048
    %1051 = vset.pattern.permute.xlu0 0
    %1052 = vperm.xlu0 %1051, %v1030
    %v1053 = vpop.permute.xlu0 %1052
    %1056 = vset.pattern.permute.xlu0 0
    %1057 = vperm.xlu0 %1056, %v1031
    %v1058 = vpop.permute.xlu0 %1057
    %1061 = vset.pattern.permute.xlu0 0
    %1062 = vperm.xlu0 %1061, %v1032
    %v1063 = vpop.permute.xlu0 %1062
    %1066 = vset.pattern.permute.xlu0 0
    %1067 = vperm.xlu0 %1066, %v1033
    %v1068 = vpop.permute.xlu0 %1067
    %1071 = vset.pattern.permute.xlu0 0
    %1072 = vperm.xlu0 %1071, %v1034
    %v1073 = vpop.permute.xlu0 %1072
    %1076 = vset.pattern.permute.xlu0 0
    %1077 = vperm.xlu0 %1076, %v1035
    %v1078 = vpop.permute.xlu0 %1077
    %1081 = vset.pattern.permute.xlu0 0
    %1082 = vperm.xlu0 %1081, %v1036
    %v1083 = vpop.permute.xlu0 %1082
    %1086 = vset.pattern.permute.xlu0 0
    %1087 = vperm.xlu0 %1086, %v1037
    %v1088 = vpop.permute.xlu0 %1087
    %1091 = vset.pattern.permute.xlu0 0
    %1092 = vperm.xlu0 %1091, %v1038
    %v1093 = vpop.permute.xlu0 %1092
    %1096 = vset.pattern.permute.xlu0 0
    %1097 = vperm.xlu0 %1096, %v1039
    %v1098 = vpop.permute.xlu0 %1097
    %1101 = vset.pattern.permute.xlu0 0
    %1102 = vperm.xlu0 %1101, %v1040
    %v1103 = vpop.permute.xlu0 %1102
    %1106 = vset.pattern.permute.xlu0 0
    %1107 = vperm.xlu0 %1106, %v1041
    %v1108 = vpop.permute.xlu0 %1107
    %1111 = vset.pattern.permute.xlu0 0
    %1112 = vperm.xlu0 %1111, %v1042
    %v1113 = vpop.permute.xlu0 %1112
    %1116 = vset.pattern.permute.xlu0 0
    %1117 = vperm.xlu0 %1116, %v1043
    %v1118 = vpop.permute.xlu0 %1117
    %1121 = vset.pattern.permute.xlu0 0
    %1122 = vperm.xlu0 %1121, %v1044
    %v1123 = vpop.permute.xlu0 %1122
    %1126 = vset.pattern.permute.xlu0 0
    %1127 = vperm.xlu0 %1126, %v1045
    %v1128 = vpop.permute.xlu0 %1127
    %v1130 = vsub.f32 %v1049, %v1053
    %v1131 = vsub.f32 %v1049, %v1058
    %v1132 = vsub.f32 %v1049, %v1063
    %v1133 = vsub.f32 %v1049, %v1068
    %v1134 = vsub.f32 %v1049, %v1073
    %v1135 = vsub.f32 %v1049, %v1078
    %v1136 = vsub.f32 %v1049, %v1083
    %v1137 = vsub.f32 %v1049, %v1088
    %v1138 = vsub.f32 %v1049, %v1093
    %v1139 = vsub.f32 %v1049, %v1098
    %v1140 = vsub.f32 %v1049, %v1103
    %v1141 = vsub.f32 %v1049, %v1108
    %v1142 = vsub.f32 %v1049, %v1113
    %v1143 = vsub.f32 %v1049, %v1118
    %v1144 = vsub.f32 %v1049, %v1123
    %v1145 = vsub.f32 %v1049, %v1128
    %v1146 = vsub.f32 1.0, %v1130
    %v1147 = vsub.f32 1.0, %v1131
    %v1148 = vsub.f32 1.0, %v1132
    %v1149 = vsub.f32 1.0, %v1133
    %v1150 = vsub.f32 1.0, %v1134
    %v1151 = vsub.f32 1.0, %v1135
    %v1152 = vsub.f32 1.0, %v1136
    %v1153 = vsub.f32 1.0, %v1137
    %v1154 = vsub.f32 1.0, %v1138
    %v1155 = vsub.f32 1.0, %v1139
    %v1156 = vsub.f32 1.0, %v1140
    %v1157 = vsub.f32 1.0, %v1141
    %v1158 = vsub.f32 1.0, %v1142
    %v1159 = vsub.f32 1.0, %v1143
    %v1160 = vsub.f32 1.0, %v1144
    %v1161 = vsub.f32 1.0, %v1145
    %v1162 = vmax.f32 %v1146, 0.0
    %v1163 = vmax.f32 %v1147, 0.0
    %v1164 = vmax.f32 %v1148, 0.0
    %v1165 = vmax.f32 %v1149, 0.0
    %v1166 = vmax.f32 %v1150, 0.0
    %v1167 = vmax.f32 %v1151, 0.0
    %v1168 = vmax.f32 %v1152, 0.0
    %v1169 = vmax.f32 %v1153, 0.0
    %v1170 = vmax.f32 %v1154, 0.0
    %v1171 = vmax.f32 %v1155, 0.0
    %v1172 = vmax.f32 %v1156, 0.0
    %v1173 = vmax.f32 %v1157, 0.0
    %v1174 = vmax.f32 %v1158, 0.0
    %v1175 = vmax.f32 %v1159, 0.0
    %v1176 = vmax.f32 %v1160, 0.0
    %v1177 = vmax.f32 %v1161, 0.0
    %v1178 = vmul.f32 %v1162, %v1162
    %v1179 = vmul.f32 %v1163, %v1163
    %v1180 = vmul.f32 %v1164, %v1164
    %v1181 = vmul.f32 %v1165, %v1165
    %v1182 = vmul.f32 %v1166, %v1166
    %v1183 = vmul.f32 %v1167, %v1167
    %v1184 = vmul.f32 %v1168, %v1168
    %v1185 = vmul.f32 %v1169, %v1169
    %v1186 = vmul.f32 %v1170, %v1170
    %v1187 = vmul.f32 %v1171, %v1171
    %v1188 = vmul.f32 %v1172, %v1172
    %v1189 = vmul.f32 %v1173, %v1173
    %v1190 = vmul.f32 %v1174, %v1174
    %v1191 = vmul.f32 %v1175, %v1175
    %v1192 = vmul.f32 %v1176, %v1176
    %v1193 = vmul.f32 %v1177, %v1177
    %1194 = vmatprep.subr.mxu0 0.0
    %1195 = vmatpush1.msra.mxu0 %v1178
    %1196 = vmatprep.subr.mxu0 0.0
    %1197 = vmatpush1.msra.mxu0 %v1179
    %1198 = vmatprep.subr.mxu0 0.0
    %1199 = vmatpush1.msra.mxu0 %v1180
    %1200 = vmatprep.subr.mxu0 0.0
    %1201 = vmatpush1.msra.mxu0 %v1181
    %1202 = vmatprep.subr.mxu0 0.0
    %1203 = vmatpush1.msra.mxu0 %v1182
    %1204 = vmatprep.subr.mxu0 0.0
    %1205 = vmatpush1.msra.mxu0 %v1183
    %1206 = vmatprep.subr.mxu0 0.0
    %1207 = vmatpush1.msra.mxu0 %v1184
    %1208 = vmatprep.subr.mxu0 0.0
    %1209 = vmatpush1.msra.mxu0 %v1185
    %1210 = vmatprep.subr.mxu0 0.0
    %1211 = vmatpush1.msra.mxu0 %v1186
    %1212 = vmatprep.subr.mxu0 0.0
    %1213 = vmatpush1.msra.mxu0 %v1187
    %1214 = vmatprep.subr.mxu0 0.0
    %1215 = vmatpush1.msra.mxu0 %v1188
    %1216 = vmatprep.subr.mxu0 0.0
    %1217 = vmatpush1.msra.mxu0 %v1189
    %1218 = vmatprep.subr.mxu0 0.0
    %1219 = vmatpush1.msra.mxu0 %v1190
    %1220 = vmatprep.subr.mxu0 0.0
    %1221 = vmatpush1.msra.mxu0 %v1191
    %1222 = vmatprep.subr.mxu0 0.0
    %1223 = vmatpush1.msra.mxu0 %v1192
    %1224 = vmatprep.subr.mxu0 0.0
    %1225 = vmatpush1.msra.mxu0 %v1193
    %1226 = vmatprep.subr.mxu0 0.0
    %1227 = vmatpush1.msra.mxu0 0.0
    %1228 = vmatprep.subr.mxu0 0.0
    %1229 = vmatpush1.msra.mxu0 0.0
    %1230 = vmatprep.subr.mxu0 0.0
    %1231 = vmatpush1.msra.mxu0 0.0
    %1232 = vmatprep.subr.mxu0 0.0
    %1233 = vmatpush1.msra.mxu0 0.0
    %1234 = vmatprep.subr.mxu0 0.0
    %1235 = vmatpush1.msra.mxu0 0.0
    %1236 = vmatprep.subr.mxu0 0.0
    %1237 = vmatpush1.msra.mxu0 0.0
    %1238 = vmatprep.subr.mxu0 0.0
    %1239 = vmatpush1.msra.mxu0 0.0
    %1240 = vmatprep.subr.mxu0 0.0
    %1241 = vmatpush1.msra.mxu0 0.0
    %1242 = vmatprep.subr.mxu0 0.0
    %1243 = vmatpush1.msra.mxu0 0.0
    %1244 = vmatprep.subr.mxu0 0.0
    %1245 = vmatpush1.msra.mxu0 0.0
    %1246 = vmatprep.subr.mxu0 0.0
    %1247 = vmatpush1.msra.mxu0 0.0
    %1248 = vmatprep.subr.mxu0 0.0
    %1249 = vmatpush1.msra.mxu0 0.0
    %1250 = vmatprep.subr.mxu0 0.0
    %1251 = vmatpush1.msra.mxu0 0.0
    %1252 = vmatprep.subr.mxu0 0.0
    %1253 = vmatpush1.msra.mxu0 0.0
    %1254 = vmatprep.subr.mxu0 0.0
    %1255 = vmatpush1.msra.mxu0 0.0
    %1256 = vmatprep.subr.mxu0 0.0
    %1257 = vmatpush1.msra.mxu0 0.0
    %1258 = vmatprep.mubr.f32.mxu0 0.0
    %1259 = vmatmul.mubr.f32.gmra.mrb[0].mxu0 %v1009
    %v1260 = vpop.f32.mrb[0].mxu0
    %v1261 = vadd.f32 0.0, %v1260
    %v1262 = vpop.f32.mrb[0].mxu0
    %1263 = vdwg.mxu0
    %v1264 = vmul.f32 %v1009, 0.1
    %v1265 = vmul.f32 %v1261, 0.015625
    %v1266 = vmul.f32 %v1265, 0.9
    %v1268 = vrot.slane %v1266, 5
    %v1270 = vadd.f32 %v1264, %v1268
    %v1272 = vrot.slane %v1270, 2
    %v1274 = vsel %vm1010, %v1272, %v1012
    %v1275 = vrot.slane %v1270, 3
    %v1277 = vrot.slane %v1009, 3
    %v1279 = vsel %vm1010, %v1275, %v1277
    %v1280 = vmul.f32 %v1270, %v1270
    %v1282 = vrot.slane %v1280, 2
    %v1284 = vsel %vm1010, %v1282, 1.0
    %v1286 = vrot.slane %v1261, 4
    %v1288 = vmul.f32 %v1009, %v1286
    %v1289 = vrot.slane %v1261, 6
    %v1291 = vmul.f32 %v1009, %v1289
    %v1293 = vrot.slane %v1291, 7
    %v1295 = vsub.f32 %v1288, %v1293
    %v1296 = vmul.f32 %v1295, 0.1
    %v1298 = vrot.slane %v1284, 5
    %v1300 = vrcp.pop %v1298
    %v1301 = vmul.f32 %v1296, %v1300
    %v1302 = vrot.slane %v1009, 1
    %v1304 = vsel %vm318, %v1302, 0.0
    %1305 = vadd.xlane.f32.xlu0 %v1304
    %v1306 = vpop.xlane.xlu0 %1305
    %v1307 = vrot.slane %v1306, 4
    %v1308 = vadd.f32 %v1306, %v1307
    %v1309 = vrot.slane %v1308, 2
    %v1310 = vadd.f32 %v1308, %v1309
    %v1311 = vrot.slane %v1310, 1
    %v1312 = vadd.f32 %v1310, %v1311
    %s1313 = vtos %v1312
    %s1314 = smax.f32 %s1313, 1.0
    %s1315 = smul.f32 %s1314, 64.0
    %v1316 = vstv %s1315
    %v1317 = vrcp.pop %v1316
    %s1318 = vtos %v1317
    %v1320 = vrot.slane %v1301, 3
    %v1322 = vsel %vm1010, %v1320, 0.0
    %v1323 = vstv %s1318
    %v1324 = vmul.f32 %v1322, %v1323
    %v1326 = vrot.slane %v1324, 1
    %v1329 = vrot.slane %v1279, 7
    %v1331 = vsel %vm318, %v1326, %v1274
    %v1332 = vsel %vm347, %v1331, %v1329
    %v1333 = vsel %vm349, %v1332, 0.0
    %s1334 = scalar_lea.vmem [#allocation5], 24
    %1335 = vst [vmem:[%s1334] sm:$0xff] %v1333
    // Predicated region
    $region10: #{tpu_custom_call.1} parent=1 // pred_check
      _
    $region11: #{tpu_custom_call.1} parent=1 // pred_check_branch
      %1337 = sbr.rel (0) target = $region13
    $region12: #{tpu_custom_call.1} parent=1 // pred_region
      %s1339 = ssub.s32 512, 512
      %1340 = vsyncadd [#allocation4], %s1339
      %s1341 = sshll.u32 [#allocation5], 4
      %s1342 = int_to_ptr.vmem [resolvable:$true] %s1341
      %1347 = dma.vmem_to_hbm [thread:$0]  %s1342, 512, %s1, [#allocation4], 128, 128, 8
    $region13: #{tpu_custom_call.1} parent=1 // pred_fallthru
      _
    // Predicated region
    $region14: #{tpu_custom_call.1} parent=1 // pred_check
      _
    $region15: #{tpu_custom_call.1} parent=1 // pred_check_branch
      %1349 = sbr.rel (0) target = $region17
    $region16: #{tpu_custom_call.1} parent=1 // pred_region
      %1350 = dma.done [#allocation4], 512
    $region17: #{tpu_custom_call.1} parent=1 // pred_fallthru
      _
    %1351 = vsyncpa [#allocation3], 1
    %1352 = vsyncpa [#allocation4], 1

</llo_original>
